<compile_context>
chip_gen: v7x
topology: tpu7x:2x2x1
jax: 0.10.0
libtpu: 0.0.40
codegen_flags: <defaults>
</compile_context>

<pallas_src>
import jax
import jax.numpy as jnp
from jax.experimental import pallas as pl
from jax.experimental.pallas import tpu as pltpu


def _round_up(x, m):
    return ((x + m - 1) // m) * m


def _disc_kernel(cw_ref, names_ref, w_ref, b_ref, imgs_ref, out_ref):
    # grid = (j: output-column tiles [parallel], k: reduction tiles [arbitrary])
    k = pl.program_id(1)

    @pl.when(k == 0)
    def _():
        out_ref[...] = jnp.zeros_like(out_ref)

    # MXU hot path: bf16 @ bf16 -> f32, accumulated directly into the output
    # block, which stays resident across the k axis (constant block index).
    out_ref[...] += jnp.dot(names_ref[...], w_ref[...],
                            preferred_element_type=jnp.float32)

    @pl.when(k == pl.num_programs(1) - 1)
    def _():
        z = out_ref[...] + b_ref[...]                        # (B, tn) + (1, tn)
        s = pl.reciprocal(1.0 + jnp.exp(-z), approx=True)    # sigmoid via EUP
        # conv1 with kernel (2,1), no bias:  w0 * imgs_row + w1 * sigmoid_row
        out_ref[...] = cw_ref[0] * imgs_ref[...] + cw_ref[1] * s


def discriminator_forward(imgs, imgnames, fc_w, fc_b, conv_w, *,
                          tn=1024, tk=2048, stream_dtype=jnp.bfloat16):
    """imgs: (B, D_OUT) f32, imgnames: (B, D_IN) f32,
    fc_w: (D_IN, D_OUT) f32 (transposed vs. PyTorch's (out, in)),
    fc_b: (D_OUT,) f32, conv_w: (1, 1, 2, 1) f32."""
    B, d_out = imgs.shape
    d_in = imgnames.shape[1]
    assert fc_w.shape == (d_in, d_out)
    assert d_out % 128 == 0, "output feature dim must be lane-aligned"

    # --- tile sizes -----------------------------------------------------
    tn = min(tn, d_out)
    assert d_out % tn == 0

    k_aligned = _round_up(d_in, 128)
    tk = min(tk, k_aligned)
    k_pad = _round_up(d_in, tk)          # e.g. 10000 -> 10240 with tk=2048

    # --- wrapper-side padding (zeros are neutral for the matmul) + bf16 ---
    if k_pad != d_in:
        imgnames = jnp.pad(imgnames, ((0, 0), (0, k_pad - d_in)))
        fc_w = jnp.pad(fc_w, ((0, k_pad - d_in), (0, 0)))
    names_s = imgnames.astype(stream_dtype)
    w_s = fc_w.astype(stream_dtype)

    bias2d = fc_b.reshape(1, d_out).astype(jnp.float32)
    cw = conv_w.reshape(2).astype(jnp.float32)      # [w0, w1] scalars in SMEM
    imgs = imgs.astype(jnp.float32)

    grid = (d_out // tn, k_pad // tk)

    return pl.pallas_call(
        _disc_kernel,
        out_shape=jax.ShapeDtypeStruct((B, d_out), jnp.float32),
        grid_spec=pltpu.PrefetchScalarGridSpec(
            num_scalar_prefetch=0,
            grid=grid,
            in_specs=[
                # conv weights: 2 scalars, whole array in SMEM
                pl.BlockSpec(memory_space=pltpu.MemorySpace.SMEM),
                # imgnames: (B, tk) tile, marches along k
                pl.BlockSpec((B, tk), lambda j, k: (0, k)),
                # fc weight: (tk, tn) tile -- the HBM-streaming hot input
                pl.BlockSpec((tk, tn), lambda j, k: (k, j)),
                # fc bias: (1, tn) tile
                pl.BlockSpec((1, tn), lambda j, k: (0, j)),
                # imgs: (B, tn) tile (only consumed at the last k step)
                pl.BlockSpec((B, tn), lambda j, k: (0, j)),
            ],
            out_specs=pl.BlockSpec((B, tn), lambda j, k: (0, j)),
        ),
        compiler_params=pltpu.CompilerParams(
            dimension_semantics=("parallel", "arbitrary"),
            # bf16 2048x1024 weight tile = 4 MiB, double-buffered = 8 MiB;
            # 40 MiB leaves ample pipeline headroom on v5e/v6e and stays
            # comfortably under v7x's 64 MiB physical VMEM.
            vmem_limit_bytes=40 * 1024 * 1024,
        ),
    )(cw, names_s, w_s, bias2d, imgs)


if __name__ == "__main__":
    # Small shapes consistent with the module's structure
    # (original D_IN=10000, D_OUT=12288 scaled down; D_IN deliberately not a
    #  multiple of 128 to exercise the K-padding path).
    B, D_IN, D_OUT = 2, 500, 1024

    key = jax.random.PRNGKey(0)
    k1, k2, k3, k4, k5 = jax.random.split(key, 5)

    # Deterministic synthetic parameters (shapes follow the module's __init__).
    fc_w = jax.random.normal(k1, (D_IN, D_OUT), jnp.float32) / jnp.sqrt(D_IN)
    fc_b = jax.random.normal(k2, (D_OUT,), jnp.float32) * 0.01
    conv_w = jax.random.normal(k3, (1, 1, 2, 1), jnp.float32)  # Conv2d(1,1,(2,1))

    imgs = jax.random.normal(k4, (B, D_OUT), jnp.float32)
    imgnames = jax.random.normal(k5, (B, D_IN), jnp.float32)

    out = discriminator_forward(imgs, imgnames, fc_w, fc_b, conv_w)
    out = jax.block_until_ready(out)
    assert out.shape == (B, D_OUT)

    cw0 = conv_w[0, 0, 0, 0]
    cw1 = conv_w[0, 0, 1, 0]

    # Reference matched to the kernel's bf16 streaming (f32 accumulation).
    z_q = (imgnames.astype(jnp.bfloat16).astype(jnp.float32)
           @ fc_w.astype(jnp.bfloat16).astype(jnp.float32)) + fc_b
    ref_q = cw0 * imgs + cw1 * jax.nn.sigmoid(z_q)
    assert jnp.allclose(out, ref_q, atol=1e-2, rtol=1e-2)

    # Looser sanity check against the exact f32 PyTorch-equivalent forward.
    ref_f32 = cw0 * imgs + cw1 * jax.nn.sigmoid(imgnames @ fc_w + fc_b)
    assert jnp.allclose(out, ref_f32, atol=1e-1, rtol=1e-1)

    print("KERNEL_OK")
</pallas_src>

<mosaic_0001>
module attributes {stable_mosaic.version = 11 : i64} {
  func.func @_disc_kernel(%arg0: i32, %arg1: i32, %arg2: memref<2xf32, #tpu.memory_space<smem>>, %arg3: memref<2x512xbf16, #tpu.memory_space<vmem>>, %arg4: memref<512x1024xbf16, #tpu.memory_space<vmem>>, %arg5: memref<1x1024xf32, #tpu.memory_space<vmem>>, %arg6: memref<2x1024xf32, #tpu.memory_space<vmem>>, %arg7: memref<2x1024xf32, #tpu.memory_space<vmem>>) attributes {dimension_semantics = [#tpu.dimension_semantics<parallel>, #tpu.dimension_semantics<arbitrary>], iteration_bounds = array<i64: 1, 1>, scalar_prefetch = 0 : i64, scratch_operands = 0 : i64, tpu.core_type = #tpu.core_type<tc>, window_params = [{transform_indices = @transform_0, window_bounds = array<i64: 2>}, {transform_indices = @transform_1, window_bounds = array<i64: 2, 512>}, {transform_indices = @transform_2, window_bounds = array<i64: 512, 1024>}, {transform_indices = @transform_3, window_bounds = array<i64: 1, 1024>}, {transform_indices = @transform_4, window_bounds = array<i64: 2, 1024>}, {transform_indices = @transform_5, window_bounds = array<i64: 2, 1024>}]} {
    %c0_i32 = arith.constant 0 : i32
    %0 = arith.cmpi eq, %arg1, %c0_i32 : i32
    %1 = arith.extui %0 : i1 to i32
    %c0_i32_0 = arith.constant 0 : i32
    %2 = arith.cmpi ne, %1, %c0_i32_0 : i32
    scf.if %2 {
      %cst_10 = arith.constant 0.000000e+00 : f32
      %12 = vector.broadcast %cst_10 : f32 to vector<2x1024xf32>
      %c0_11 = arith.constant 0 : index
      %c0_12 = arith.constant 0 : index
      %13 = vector.load %arg7[%c0_11, %c0_12] : memref<2x1024xf32, #tpu.memory_space<vmem>>, vector<2x1024xf32>
      tpu.vector_store %arg7[%c0_11, %c0_12], %12 {strides = array<i32>} : memref<2x1024xf32, #tpu.memory_space<vmem>>, vector<2x1024xf32>,
    } else {
    }
    %c0 = arith.constant 0 : index
    %c0_1 = arith.constant 0 : index
    %3 = vector.load %arg7[%c0, %c0_1] : memref<2x1024xf32, #tpu.memory_space<vmem>>, vector<2x1024xf32>
    %c0_2 = arith.constant 0 : index
    %c0_3 = arith.constant 0 : index
    %4 = vector.load %arg3[%c0_2, %c0_3] : memref<2x512xbf16, #tpu.memory_space<vmem>>, vector<2x512xbf16>
    %c0_4 = arith.constant 0 : index
    %c0_5 = arith.constant 0 : index
    %5 = vector.load %arg4[%c0_4, %c0_5] : memref<512x1024xbf16, #tpu.memory_space<vmem>>, vector<512x1024xbf16>
    %cst = arith.constant dense<0.000000e+00> : vector<2x1024xf32>
    %6 = tpu.matmul %4, %5, %cst {dimension_numbers = #tpu.dot_dimension_numbers<[1], [0], [0], [1], [0, 0, 1, 1], [], []>} : vector<2x512xbf16>, vector<512x1024xbf16>, vector<2x1024xf32> -> vector<2x1024xf32>
    %7 = arith.addf %3, %6 : vector<2x1024xf32>
    %c0_6 = arith.constant 0 : index
    %c0_7 = arith.constant 0 : index
    %8 = vector.load %arg7[%c0_6, %c0_7] : memref<2x1024xf32, #tpu.memory_space<vmem>>, vector<2x1024xf32>
    tpu.vector_store %arg7[%c0_6, %c0_7], %7 {strides = array<i32>} : memref<2x1024xf32, #tpu.memory_space<vmem>>, vector<2x1024xf32>,
    %c0_i32_8 = arith.constant 0 : i32
    %9 = arith.cmpi eq, %arg1, %c0_i32_8 : i32
    %10 = arith.extui %9 : i1 to i32
    %c0_i32_9 = arith.constant 0 : i32
    %11 = arith.cmpi ne, %10, %c0_i32_9 : i32
    scf.if %11 {
      %c0_10 = arith.constant 0 : index
      %c0_11 = arith.constant 0 : index
      %12 = vector.load %arg7[%c0_10, %c0_11] : memref<2x1024xf32, #tpu.memory_space<vmem>>, vector<2x1024xf32>
      %c0_12 = arith.constant 0 : index
      %c0_13 = arith.constant 0 : index
      %13 = vector.load %arg5[%c0_12, %c0_13] : memref<1x1024xf32, #tpu.memory_space<vmem>>, vector<1x1024xf32>
      %14 = vector.broadcast %13 : vector<1x1024xf32> to vector<2x1024xf32>
      %15 = arith.addf %12, %14 : vector<2x1024xf32>
      %cst_14 = arith.constant 0.000000e+00 : f32
      %16 = vector.broadcast %cst_14 : f32 to vector<2x1024xf32>
      %17 = arith.subf %16, %15 : vector<2x1024xf32>
      %18 = math.exp %17 : vector<2x1024xf32>
      %cst_15 = arith.constant 1.000000e+00 : f32
      %19 = vector.broadcast %cst_15 : f32 to vector<2x1024xf32>
      %20 = arith.addf %19, %18 : vector<2x1024xf32>
      %21 = tpu.reciprocal %20 {approx = true} : vector<2x1024xf32> -> vector<2x1024xf32>
      %c0_16 = arith.constant 0 : index
      %22 = memref.load %arg2[%c0_16] : memref<2xf32, #tpu.memory_space<smem>>
      %c0_17 = arith.constant 0 : index
      %c0_18 = arith.constant 0 : index
      %23 = vector.load %arg6[%c0_17, %c0_18] : memref<2x1024xf32, #tpu.memory_space<vmem>>, vector<2x1024xf32>
      %24 = vector.broadcast %22 : f32 to vector<2x1024xf32>
      %25 = arith.mulf %24, %23 : vector<2x1024xf32>
      %c1 = arith.constant 1 : index
      %26 = memref.load %arg2[%c1] : memref<2xf32, #tpu.memory_space<smem>>
      %27 = vector.broadcast %26 : f32 to vector<2x1024xf32>
      %28 = arith.mulf %27, %21 : vector<2x1024xf32>
      %29 = arith.addf %25, %28 : vector<2x1024xf32>
      %c0_19 = arith.constant 0 : index
      %c0_20 = arith.constant 0 : index
      %30 = vector.load %arg7[%c0_19, %c0_20] : memref<2x1024xf32, #tpu.memory_space<vmem>>, vector<2x1024xf32>
      tpu.vector_store %arg7[%c0_19, %c0_20], %29 {strides = array<i32>} : memref<2x1024xf32, #tpu.memory_space<vmem>>, vector<2x1024xf32>,
    } else {
    }
    return
  }
  func.func @transform_0(%arg0: i32, %arg1: i32) -> i32 {
    %c0_i32 = arith.constant 0 : i32
    %c0_i32_0 = arith.constant 0 : i32
    return %c0_i32 : i32
  }
  func.func @transform_1(%arg0: i32, %arg1: i32) -> (i32, i32) {
    %c0_i32 = arith.constant 0 : i32
    %c0_i32_0 = arith.constant 0 : i32
    return %c0_i32, %arg1 : i32, i32
  }
  func.func @transform_2(%arg0: i32, %arg1: i32) -> (i32, i32) {
    %c0_i32 = arith.constant 0 : i32
    return %arg1, %arg0 : i32, i32
  }
  func.func @transform_3(%arg0: i32, %arg1: i32) -> (i32, i32) {
    %c0_i32 = arith.constant 0 : i32
    %c0_i32_0 = arith.constant 0 : i32
    return %c0_i32, %arg0 : i32, i32
  }
  func.func @transform_4(%arg0: i32, %arg1: i32) -> (i32, i32) {
    %c0_i32 = arith.constant 0 : i32
    %c0_i32_0 = arith.constant 0 : i32
    return %c0_i32, %arg0 : i32, i32
  }
  func.func @transform_5(%arg0: i32, %arg1: i32) -> (i32, i32) {
    %c0_i32 = arith.constant 0 : i32
    %c0_i32_0 = arith.constant 0 : i32
    return %c0_i32, %arg0 : i32, i32
  }
}

</mosaic_0001>

<llo_original>
// kernel: tpu_custom_call.1
$region0: #{tpu_custom_call.1}
  #allocation0 [shape = 'u32[]', space=smem, size = 0x4, offset = 0x4, fixed_abs, tag = 'smem constant byte address 0x4 - core index']
  #allocation1 [shape = 'u32[144,128]{1,0:T(1,128)}', space=vmem, size = 0x12000, scoped, tag = 'internal scratch']
  %s0 = inlined_call_operand.hbm [shape: f32[2], index: 0, kind: input, shape index: {}]
  %s1 = inlined_call_operand.hbm [shape: bf16[2,512], index: 1, kind: input, shape index: {}]
  %s2 = inlined_call_operand.hbm [shape: bf16[512,1024], index: 2, kind: input, shape index: {}]
  %s3 = inlined_call_operand.vmem [shape: f32[1,1024], index: 3, kind: input, shape index: {}]
  %s4 = inlined_call_operand.hbm [shape: f32[2,1024], index: 4, kind: input, shape index: {}]
  %s5 = inlined_call_operand.hbm [shape: f32[2,1024], index: 5, kind: output, shape index: {}]
  %s6 = sld [smem:[#allocation0]]
  $region54: #{tpu_custom_call.1} parent=0
    _
  %s8 = ssub.s32 1, %s6
  %s9 = scalar_select 0, %s8, %s6
  $region1: #{tpu_custom_call.1} parent=0
    #allocation2 [shape = 'u8[512]{0}', space=smem, size = 0x200, scoped, tag = 'input window, operand 0, single buffered']
    #allocation3 [shape = 's32[1]{0}', space=sflag, size = 0x4, scoped, tag = 'scoped memory for tpu_custom_call.1']
    #allocation4 [shape = 's32[1]{0}', space=sflag, size = 0x4, scoped, tag = 'scoped memory for tpu_custom_call.1']
    #allocation5 [shape = 's32[1]{0}', space=sflag, size = 0x4, scoped, tag = 'scoped memory for tpu_custom_call.1']
    #allocation6 [shape = 'u8[2048]{0}', space=vmem, size = 0x800, scoped, tag = 'input window, operand 1, single buffered']
    #allocation7 [shape = 'u8[1048576]{0}', space=vmem, size = 0x100000, scoped, tag = 'input window, operand 2, single buffered']
    #allocation8 [shape = 's32[1]{0}', space=sflag, size = 0x4, scoped, tag = 'scoped memory for tpu_custom_call.1']
    #allocation9 [shape = 'u8[8192]{0}', space=vmem, size = 0x2000, scoped, tag = 'input window, operand 4, single buffered']
    #allocation10 [shape = 'u8[8192]{0}', space=vmem, size = 0x2000, scoped, tag = 'output window, operand 0, single buffered']
    %10 = vsyncpa [#allocation5], 0
    %11 = vsyncpa [#allocation3], 0
    %12 = vsyncpa [#allocation8], 0
    %13 = vsyncpa [#allocation4], 0
    // Predicated region
    $region2: #{tpu_custom_call.1} parent=1 // pred_check
      _
    $region3: #{tpu_custom_call.1} parent=1 // pred_check_branch
      %15 = sbr.rel (0) target = $region5
    $region4: #{tpu_custom_call.1} parent=1 // pred_region
      %s17 = ssub.s32 16, 16
      %18 = vsyncadd [#allocation5], %s17
      %21 = dma.hbm_to_smem %s0, 16, [#allocation2], [#allocation5]
    $region5: #{tpu_custom_call.1} parent=1 // pred_fallthru
      _
    // Predicated region
    $region6: #{tpu_custom_call.1} parent=1 // pred_check
      _
    $region7: #{tpu_custom_call.1} parent=1 // pred_check_branch
      %23 = sbr.rel (0) target = $region9
    $region8: #{tpu_custom_call.1} parent=1 // pred_region
      %s25 = ssub.s32 64, 64
      %26 = vsyncadd [#allocation3], %s25
      %s28 = sshll.u32 [#allocation6], 4
      %s29 = int_to_ptr.vmem [resolvable:$true] %s28
      %31 = dma.hbm_to_vmem [thread:$0]  %s1, 64, %s29, [#allocation3]
    $region9: #{tpu_custom_call.1} parent=1 // pred_fallthru
      _
    // Predicated region
    $region10: #{tpu_custom_call.1} parent=1 // pred_check
      _
    $region11: #{tpu_custom_call.1} parent=1 // pred_check_branch
      %33 = sbr.rel (0) target = $region13
    $region12: #{tpu_custom_call.1} parent=1 // pred_region
      %s35 = ssub.s32 32768, 32768
      %36 = vsyncadd [#allocation8], %s35
      %s37 = sshll.u32 [#allocation7], 4
      %s38 = int_to_ptr.vmem [resolvable:$true] %s37
      %43 = dma.hbm_to_vmem [thread:$0]  %s2, 32768, %s38, [#allocation8], 512, 512, 32
    $region13: #{tpu_custom_call.1} parent=1 // pred_fallthru
      _
    // Predicated region
    $region14: #{tpu_custom_call.1} parent=1 // pred_check
      _
    $region15: #{tpu_custom_call.1} parent=1 // pred_check_branch
      %45 = sbr.rel (0) target = $region17
    $region16: #{tpu_custom_call.1} parent=1 // pred_region
      _
    $region17: #{tpu_custom_call.1} parent=1 // pred_fallthru
      _
    // Predicated region
    $region18: #{tpu_custom_call.1} parent=1 // pred_check
      _
    $region19: #{tpu_custom_call.1} parent=1 // pred_check_branch
      %47 = sbr.rel (0) target = $region21
    $region20: #{tpu_custom_call.1} parent=1 // pred_region
      %s49 = ssub.s32 256, 256
      %50 = vsyncadd [#allocation8], %s49
      %s52 = sshll.u32 [#allocation9], 4
      %s53 = int_to_ptr.vmem [resolvable:$true] %s52
      %55 = dma.hbm_to_vmem [thread:$0]  %s4, 256, %s53, [#allocation8]
    $region21: #{tpu_custom_call.1} parent=1 // pred_fallthru
      _
    // Predicated region
    $region22: #{tpu_custom_call.1} parent=1 // pred_check
      _
    $region23: #{tpu_custom_call.1} parent=1 // pred_check_branch
      %57 = sbr.rel (0) target = $region25
    $region24: #{tpu_custom_call.1} parent=1 // pred_region
      %58 = dma.done [#allocation5], 16
    $region25: #{tpu_custom_call.1} parent=1 // pred_fallthru
      _
    // Predicated region
    $region26: #{tpu_custom_call.1} parent=1 // pred_check
      _
    $region27: #{tpu_custom_call.1} parent=1 // pred_check_branch
      %60 = sbr.rel (0) target = $region29
    $region28: #{tpu_custom_call.1} parent=1 // pred_region
      %61 = dma.done [#allocation3], 64
    $region29: #{tpu_custom_call.1} parent=1 // pred_fallthru
      _
    // Predicated region
    $region30: #{tpu_custom_call.1} parent=1 // pred_check
      _
    $region31: #{tpu_custom_call.1} parent=1 // pred_check_branch
      %63 = sbr.rel (0) target = $region33
    $region32: #{tpu_custom_call.1} parent=1 // pred_region
      %64 = dma.done [#allocation8], 32768
    $region33: #{tpu_custom_call.1} parent=1 // pred_fallthru
      _
    // Predicated region
    $region34: #{tpu_custom_call.1} parent=1 // pred_check
      _
    $region35: #{tpu_custom_call.1} parent=1 // pred_check_branch
      %66 = sbr.rel (0) target = $region37
    $region36: #{tpu_custom_call.1} parent=1 // pred_region
      %67 = dma.done [#allocation8], 256
    $region37: #{tpu_custom_call.1} parent=1 // pred_fallthru
      _
    %68 = sfence
    %p69 = scmp.eq.s32.totalorder 0, 0
    // Predicated region
    $region38: #{tpu_custom_call.1} parent=1 // pred_check
      %p70 = pneg %p69
    $region39: #{tpu_custom_call.1} parent=1 // pred_check_branch
      %72 = sbr.rel (%p70) target = $region41
    $region40: #{tpu_custom_call.1} parent=1 // pred_region
      %73 = vst [vmem:[#allocation10] sm:$0xff] 0.0
      %74 = vst [vmem:[#allocation10 + $0x8] sm:$0xff] 0.0
    $region41: #{tpu_custom_call.1} parent=1 // pred_fallthru
      _
    %v75 = vld [vmem:[#allocation10] sm:$0xff]
    %v76 = vld [vmem:[#allocation10 + $0x8] sm:$0xff]
    %v77 = vld [vmem:[#allocation6] sm:$0xf]
    %v78 = vld [vmem:[#allocation7] sm:$0xff]
    %v79 = vld [vmem:[#allocation7 + $0x8] sm:$0xff]
    %v80 = vld [vmem:[#allocation7 + $0x10] sm:$0xff]
    %v81 = vld [vmem:[#allocation7 + $0x18] sm:$0xff]
    %v82 = vld [vmem:[#allocation7 + $0x20] sm:$0xff]
    %v83 = vld [vmem:[#allocation7 + $0x28] sm:$0xff]
    %v84 = vld [vmem:[#allocation7 + $0x30] sm:$0xff]
    %v85 = vld [vmem:[#allocation7 + $0x38] sm:$0xff]
    %v86 = vld [vmem:[#allocation7 + $0x40] sm:$0xff]
    %v87 = vld [vmem:[#allocation7 + $0x48] sm:$0xff]
    %v88 = vld [vmem:[#allocation7 + $0x50] sm:$0xff]
    %v89 = vld [vmem:[#allocation7 + $0x58] sm:$0xff]
    %v90 = vld [vmem:[#allocation7 + $0x60] sm:$0xff]
    %v91 = vld [vmem:[#allocation7 + $0x68] sm:$0xff]
    %v92 = vld [vmem:[#allocation7 + $0x70] sm:$0xff]
    %v93 = vld [vmem:[#allocation7 + $0x78] sm:$0xff]
    %v94 = vld [vmem:[#allocation7 + $0x80] sm:$0xff]
    %v95 = vld [vmem:[#allocation7 + $0x88] sm:$0xff]
    %v96 = vld [vmem:[#allocation7 + $0x90] sm:$0xff]
    %v97 = vld [vmem:[#allocation7 + $0x98] sm:$0xff]
    %v98 = vld [vmem:[#allocation7 + $0xa0] sm:$0xff]
    %v99 = vld [vmem:[#allocation7 + $0xa8] sm:$0xff]
    %v100 = vld [vmem:[#allocation7 + $0xb0] sm:$0xff]
    %v101 = vld [vmem:[#allocation7 + $0xb8] sm:$0xff]
    %v102 = vld [vmem:[#allocation7 + $0xc0] sm:$0xff]
    %v103 = vld [vmem:[#allocation7 + $0xc8] sm:$0xff]
    %v104 = vld [vmem:[#allocation7 + $0xd0] sm:$0xff]
    %v105 = vld [vmem:[#allocation7 + $0xd8] sm:$0xff]
    %v106 = vld [vmem:[#allocation7 + $0xe0] sm:$0xff]
    %v107 = vld [vmem:[#allocation7 + $0xe8] sm:$0xff]
    %v108 = vld [vmem:[#allocation7 + $0xf0] sm:$0xff]
    %v109 = vld [vmem:[#allocation7 + $0xf8] sm:$0xff]
    %v110 = vld [vmem:[#allocation7 + $0x100] sm:$0xff]
    %v111 = vld [vmem:[#allocation7 + $0x108] sm:$0xff]
    %v112 = vld [vmem:[#allocation7 + $0x110] sm:$0xff]
    %v113 = vld [vmem:[#allocation7 + $0x118] sm:$0xff]
    %v114 = vld [vmem:[#allocation7 + $0x120] sm:$0xff]
    %v115 = vld [vmem:[#allocation7 + $0x128] sm:$0xff]
    %v116 = vld [vmem:[#allocation7 + $0x130] sm:$0xff]
    %v117 = vld [vmem:[#allocation7 + $0x138] sm:$0xff]
    %v118 = vld [vmem:[#allocation7 + $0x140] sm:$0xff]
    %v119 = vld [vmem:[#allocation7 + $0x148] sm:$0xff]
    %v120 = vld [vmem:[#allocation7 + $0x150] sm:$0xff]
    %v121 = vld [vmem:[#allocation7 + $0x158] sm:$0xff]
    %v122 = vld [vmem:[#allocation7 + $0x160] sm:$0xff]
    %v123 = vld [vmem:[#allocation7 + $0x168] sm:$0xff]
    %v124 = vld [vmem:[#allocation7 + $0x170] sm:$0xff]
    %v125 = vld [vmem:[#allocation7 + $0x178] sm:$0xff]
    %v126 = vld [vmem:[#allocation7 + $0x180] sm:$0xff]
    %v127 = vld [vmem:[#allocation7 + $0x188] sm:$0xff]
    %v128 = vld [vmem:[#allocation7 + $0x190] sm:$0xff]
    %v129 = vld [vmem:[#allocation7 + $0x198] sm:$0xff]
    %v130 = vld [vmem:[#allocation7 + $0x1a0] sm:$0xff]
    %v131 = vld [vmem:[#allocation7 + $0x1a8] sm:$0xff]
    %v132 = vld [vmem:[#allocation7 + $0x1b0] sm:$0xff]
    %v133 = vld [vmem:[#allocation7 + $0x1b8] sm:$0xff]
    %v134 = vld [vmem:[#allocation7 + $0x1c0] sm:$0xff]
    %v135 = vld [vmem:[#allocation7 + $0x1c8] sm:$0xff]
    %v136 = vld [vmem:[#allocation7 + $0x1d0] sm:$0xff]
    %v137 = vld [vmem:[#allocation7 + $0x1d8] sm:$0xff]
    %v138 = vld [vmem:[#allocation7 + $0x1e0] sm:$0xff]
    %v139 = vld [vmem:[#allocation7 + $0x1e8] sm:$0xff]
    %v140 = vld [vmem:[#allocation7 + $0x1f0] sm:$0xff]
    %v141 = vld [vmem:[#allocation7 + $0x1f8] sm:$0xff]
    %v142 = vld [vmem:[#allocation7 + $0x200] sm:$0xff]
    %v143 = vld [vmem:[#allocation7 + $0x208] sm:$0xff]
    %v144 = vld [vmem:[#allocation7 + $0x210] sm:$0xff]
    %v145 = vld [vmem:[#allocation7 + $0x218] sm:$0xff]
    %v146 = vld [vmem:[#allocation7 + $0x220] sm:$0xff]
    %v147 = vld [vmem:[#allocation7 + $0x228] sm:$0xff]
    %v148 = vld [vmem:[#allocation7 + $0x230] sm:$0xff]
    %v149 = vld [vmem:[#allocation7 + $0x238] sm:$0xff]
    %v150 = vld [vmem:[#allocation7 + $0x240] sm:$0xff]
    %v151 = vld [vmem:[#allocation7 + $0x248] sm:$0xff]
    %v152 = vld [vmem:[#allocation7 + $0x250] sm:$0xff]
    %v153 = vld [vmem:[#allocation7 + $0x258] sm:$0xff]
    %v154 = vld [vmem:[#allocation7 + $0x260] sm:$0xff]
    %v155 = vld [vmem:[#allocation7 + $0x268] sm:$0xff]
    %v156 = vld [vmem:[#allocation7 + $0x270] sm:$0xff]
    %v157 = vld [vmem:[#allocation7 + $0x278] sm:$0xff]
    %v158 = vld [vmem:[#allocation7 + $0x280] sm:$0xff]
    %v159 = vld [vmem:[#allocation7 + $0x288] sm:$0xff]
    %v160 = vld [vmem:[#allocation7 + $0x290] sm:$0xff]
    %v161 = vld [vmem:[#allocation7 + $0x298] sm:$0xff]
    %v162 = vld [vmem:[#allocation7 + $0x2a0] sm:$0xff]
    %v163 = vld [vmem:[#allocation7 + $0x2a8] sm:$0xff]
    %v164 = vld [vmem:[#allocation7 + $0x2b0] sm:$0xff]
    %v165 = vld [vmem:[#allocation7 + $0x2b8] sm:$0xff]
    %v166 = vld [vmem:[#allocation7 + $0x2c0] sm:$0xff]
    %v167 = vld [vmem:[#allocation7 + $0x2c8] sm:$0xff]
    %v168 = vld [vmem:[#allocation7 + $0x2d0] sm:$0xff]
    %v169 = vld [vmem:[#allocation7 + $0x2d8] sm:$0xff]
    %v170 = vld [vmem:[#allocation7 + $0x2e0] sm:$0xff]
    %v171 = vld [vmem:[#allocation7 + $0x2e8] sm:$0xff]
    %v172 = vld [vmem:[#allocation7 + $0x2f0] sm:$0xff]
    %v173 = vld [vmem:[#allocation7 + $0x2f8] sm:$0xff]
    %v174 = vld [vmem:[#allocation7 + $0x300] sm:$0xff]
    %v175 = vld [vmem:[#allocation7 + $0x308] sm:$0xff]
    %v176 = vld [vmem:[#allocation7 + $0x310] sm:$0xff]
    %v177 = vld [vmem:[#allocation7 + $0x318] sm:$0xff]
    %v178 = vld [vmem:[#allocation7 + $0x320] sm:$0xff]
    %v179 = vld [vmem:[#allocation7 + $0x328] sm:$0xff]
    %v180 = vld [vmem:[#allocation7 + $0x330] sm:$0xff]
    %v181 = vld [vmem:[#allocation7 + $0x338] sm:$0xff]
    %v182 = vld [vmem:[#allocation7 + $0x340] sm:$0xff]
    %v183 = vld [vmem:[#allocation7 + $0x348] sm:$0xff]
    %v184 = vld [vmem:[#allocation7 + $0x350] sm:$0xff]
    %v185 = vld [vmem:[#allocation7 + $0x358] sm:$0xff]
    %v186 = vld [vmem:[#allocation7 + $0x360] sm:$0xff]
    %v187 = vld [vmem:[#allocation7 + $0x368] sm:$0xff]
    %v188 = vld [vmem:[#allocation7 + $0x370] sm:$0xff]
    %v189 = vld [vmem:[#allocation7 + $0x378] sm:$0xff]
    %v190 = vld [vmem:[#allocation7 + $0x380] sm:$0xff]
    %v191 = vld [vmem:[#allocation7 + $0x388] sm:$0xff]
    %v192 = vld [vmem:[#allocation7 + $0x390] sm:$0xff]
    %v193 = vld [vmem:[#allocation7 + $0x398] sm:$0xff]
    %v194 = vld [vmem:[#allocation7 + $0x3a0] sm:$0xff]
    %v195 = vld [vmem:[#allocation7 + $0x3a8] sm:$0xff]
    %v196 = vld [vmem:[#allocation7 + $0x3b0] sm:$0xff]
    %v197 = vld [vmem:[#allocation7 + $0x3b8] sm:$0xff]
    %v198 = vld [vmem:[#allocation7 + $0x3c0] sm:$0xff]
    %v199 = vld [vmem:[#allocation7 + $0x3c8] sm:$0xff]
    %v200 = vld [vmem:[#allocation7 + $0x3d0] sm:$0xff]
    %v201 = vld [vmem:[#allocation7 + $0x3d8] sm:$0xff]
    %v202 = vld [vmem:[#allocation7 + $0x3e0] sm:$0xff]
    %v203 = vld [vmem:[#allocation7 + $0x3e8] sm:$0xff]
    %v204 = vld [vmem:[#allocation7 + $0x3f0] sm:$0xff]
    %v205 = vld [vmem:[#allocation7 + $0x3f8] sm:$0xff]
    %v206 = vld [vmem:[#allocation7 + $0x400] sm:$0xff]
    %v207 = vld [vmem:[#allocation7 + $0x408] sm:$0xff]
    %v208 = vld [vmem:[#allocation7 + $0x410] sm:$0xff]
    %v209 = vld [vmem:[#allocation7 + $0x418] sm:$0xff]
    %v210 = vld [vmem:[#allocation7 + $0x420] sm:$0xff]
    %v211 = vld [vmem:[#allocation7 + $0x428] sm:$0xff]
    %v212 = vld [vmem:[#allocation7 + $0x430] sm:$0xff]
    %v213 = vld [vmem:[#allocation7 + $0x438] sm:$0xff]
    %v214 = vld [vmem:[#allocation7 + $0x440] sm:$0xff]
    %v215 = vld [vmem:[#allocation7 + $0x448] sm:$0xff]
    %v216 = vld [vmem:[#allocation7 + $0x450] sm:$0xff]
    %v217 = vld [vmem:[#allocation7 + $0x458] sm:$0xff]
    %v218 = vld [vmem:[#allocation7 + $0x460] sm:$0xff]
    %v219 = vld [vmem:[#allocation7 + $0x468] sm:$0xff]
    %v220 = vld [vmem:[#allocation7 + $0x470] sm:$0xff]
    %v221 = vld [vmem:[#allocation7 + $0x478] sm:$0xff]
    %v222 = vld [vmem:[#allocation7 + $0x480] sm:$0xff]
    %v223 = vld [vmem:[#allocation7 + $0x488] sm:$0xff]
    %v224 = vld [vmem:[#allocation7 + $0x490] sm:$0xff]
    %v225 = vld [vmem:[#allocation7 + $0x498] sm:$0xff]
    %v226 = vld [vmem:[#allocation7 + $0x4a0] sm:$0xff]
    %v227 = vld [vmem:[#allocation7 + $0x4a8] sm:$0xff]
    %v228 = vld [vmem:[#allocation7 + $0x4b0] sm:$0xff]
    %v229 = vld [vmem:[#allocation7 + $0x4b8] sm:$0xff]
    %v230 = vld [vmem:[#allocation7 + $0x4c0] sm:$0xff]
    %v231 = vld [vmem:[#allocation7 + $0x4c8] sm:$0xff]
    %v232 = vld [vmem:[#allocation7 + $0x4d0] sm:$0xff]
    %v233 = vld [vmem:[#allocation7 + $0x4d8] sm:$0xff]
    %v234 = vld [vmem:[#allocation7 + $0x4e0] sm:$0xff]
    %v235 = vld [vmem:[#allocation7 + $0x4e8] sm:$0xff]
    %v236 = vld [vmem:[#allocation7 + $0x4f0] sm:$0xff]
    %v237 = vld [vmem:[#allocation7 + $0x4f8] sm:$0xff]
    %v238 = vld [vmem:[#allocation7 + $0x500] sm:$0xff]
    %v239 = vld [vmem:[#allocation7 + $0x508] sm:$0xff]
    %v240 = vld [vmem:[#allocation7 + $0x510] sm:$0xff]
    %v241 = vld [vmem:[#allocation7 + $0x518] sm:$0xff]
    %v242 = vld [vmem:[#allocation7 + $0x520] sm:$0xff]
    %v243 = vld [vmem:[#allocation7 + $0x528] sm:$0xff]
    %v244 = vld [vmem:[#allocation7 + $0x530] sm:$0xff]
    %v245 = vld [vmem:[#allocation7 + $0x538] sm:$0xff]
    %v246 = vld [vmem:[#allocation7 + $0x540] sm:$0xff]
    %v247 = vld [vmem:[#allocation7 + $0x548] sm:$0xff]
    %v248 = vld [vmem:[#allocation7 + $0x550] sm:$0xff]
    %v249 = vld [vmem:[#allocation7 + $0x558] sm:$0xff]
    %v250 = vld [vmem:[#allocation7 + $0x560] sm:$0xff]
    %v251 = vld [vmem:[#allocation7 + $0x568] sm:$0xff]
    %v252 = vld [vmem:[#allocation7 + $0x570] sm:$0xff]
    %v253 = vld [vmem:[#allocation7 + $0x578] sm:$0xff]
    %v254 = vld [vmem:[#allocation7 + $0x580] sm:$0xff]
    %v255 = vld [vmem:[#allocation7 + $0x588] sm:$0xff]
    %v256 = vld [vmem:[#allocation7 + $0x590] sm:$0xff]
    %v257 = vld [vmem:[#allocation7 + $0x598] sm:$0xff]
    %v258 = vld [vmem:[#allocation7 + $0x5a0] sm:$0xff]
    %v259 = vld [vmem:[#allocation7 + $0x5a8] sm:$0xff]
    %v260 = vld [vmem:[#allocation7 + $0x5b0] sm:$0xff]
    %v261 = vld [vmem:[#allocation7 + $0x5b8] sm:$0xff]
    %v262 = vld [vmem:[#allocation7 + $0x5c0] sm:$0xff]
    %v263 = vld [vmem:[#allocation7 + $0x5c8] sm:$0xff]
    %v264 = vld [vmem:[#allocation7 + $0x5d0] sm:$0xff]
    %v265 = vld [vmem:[#allocation7 + $0x5d8] sm:$0xff]
    %v266 = vld [vmem:[#allocation7 + $0x5e0] sm:$0xff]
    %v267 = vld [vmem:[#allocation7 + $0x5e8] sm:$0xff]
    %v268 = vld [vmem:[#allocation7 + $0x5f0] sm:$0xff]
    %v269 = vld [vmem:[#allocation7 + $0x5f8] sm:$0xff]
    %v270 = vld [vmem:[#allocation7 + $0x600] sm:$0xff]
    %v271 = vld [vmem:[#allocation7 + $0x608] sm:$0xff]
    %v272 = vld [vmem:[#allocation7 + $0x610] sm:$0xff]
    %v273 = vld [vmem:[#allocation7 + $0x618] sm:$0xff]
    %v274 = vld [vmem:[#allocation7 + $0x620] sm:$0xff]
    %v275 = vld [vmem:[#allocation7 + $0x628] sm:$0xff]
    %v276 = vld [vmem:[#allocation7 + $0x630] sm:$0xff]
    %v277 = vld [vmem:[#allocation7 + $0x638] sm:$0xff]
    %v278 = vld [vmem:[#allocation7 + $0x640] sm:$0xff]
    %v279 = vld [vmem:[#allocation7 + $0x648] sm:$0xff]
    %v280 = vld [vmem:[#allocation7 + $0x650] sm:$0xff]
    %v281 = vld [vmem:[#allocation7 + $0x658] sm:$0xff]
    %v282 = vld [vmem:[#allocation7 + $0x660] sm:$0xff]
    %v283 = vld [vmem:[#allocation7 + $0x668] sm:$0xff]
    %v284 = vld [vmem:[#allocation7 + $0x670] sm:$0xff]
    %v285 = vld [vmem:[#allocation7 + $0x678] sm:$0xff]
    %v286 = vld [vmem:[#allocation7 + $0x680] sm:$0xff]
    %v287 = vld [vmem:[#allocation7 + $0x688] sm:$0xff]
    %v288 = vld [vmem:[#allocation7 + $0x690] sm:$0xff]
    %v289 = vld [vmem:[#allocation7 + $0x698] sm:$0xff]
    %v290 = vld [vmem:[#allocation7 + $0x6a0] sm:$0xff]
    %v291 = vld [vmem:[#allocation7 + $0x6a8] sm:$0xff]
    %v292 = vld [vmem:[#allocation7 + $0x6b0] sm:$0xff]
    %v293 = vld [vmem:[#allocation7 + $0x6b8] sm:$0xff]
    %v294 = vld [vmem:[#allocation7 + $0x6c0] sm:$0xff]
    %v295 = vld [vmem:[#allocation7 + $0x6c8] sm:$0xff]
    %v296 = vld [vmem:[#allocation7 + $0x6d0] sm:$0xff]
    %v297 = vld [vmem:[#allocation7 + $0x6d8] sm:$0xff]
    %v298 = vld [vmem:[#allocation7 + $0x6e0] sm:$0xff]
    %v299 = vld [vmem:[#allocation7 + $0x6e8] sm:$0xff]
    %v300 = vld [vmem:[#allocation7 + $0x6f0] sm:$0xff]
    %v301 = vld [vmem:[#allocation7 + $0x6f8] sm:$0xff]
    %v302 = vld [vmem:[#allocation7 + $0x700] sm:$0xff]
    %v303 = vld [vmem:[#allocation7 + $0x708] sm:$0xff]
    %v304 = vld [vmem:[#allocation7 + $0x710] sm:$0xff]
    %v305 = vld [vmem:[#allocation7 + $0x718] sm:$0xff]
    %v306 = vld [vmem:[#allocation7 + $0x720] sm:$0xff]
    %v307 = vld [vmem:[#allocation7 + $0x728] sm:$0xff]
    %v308 = vld [vmem:[#allocation7 + $0x730] sm:$0xff]
    %v309 = vld [vmem:[#allocation7 + $0x738] sm:$0xff]
    %v310 = vld [vmem:[#allocation7 + $0x740] sm:$0xff]
    %v311 = vld [vmem:[#allocation7 + $0x748] sm:$0xff]
    %v312 = vld [vmem:[#allocation7 + $0x750] sm:$0xff]
    %v313 = vld [vmem:[#allocation7 + $0x758] sm:$0xff]
    %v314 = vld [vmem:[#allocation7 + $0x760] sm:$0xff]
    %v315 = vld [vmem:[#allocation7 + $0x768] sm:$0xff]
    %v316 = vld [vmem:[#allocation7 + $0x770] sm:$0xff]
    %v317 = vld [vmem:[#allocation7 + $0x778] sm:$0xff]
    %v318 = vld [vmem:[#allocation7 + $0x780] sm:$0xff]
    %v319 = vld [vmem:[#allocation7 + $0x788] sm:$0xff]
    %v320 = vld [vmem:[#allocation7 + $0x790] sm:$0xff]
    %v321 = vld [vmem:[#allocation7 + $0x798] sm:$0xff]
    %v322 = vld [vmem:[#allocation7 + $0x7a0] sm:$0xff]
    %v323 = vld [vmem:[#allocation7 + $0x7a8] sm:$0xff]
    %v324 = vld [vmem:[#allocation7 + $0x7b0] sm:$0xff]
    %v325 = vld [vmem:[#allocation7 + $0x7b8] sm:$0xff]
    %v326 = vld [vmem:[#allocation7 + $0x7c0] sm:$0xff]
    %v327 = vld [vmem:[#allocation7 + $0x7c8] sm:$0xff]
    %v328 = vld [vmem:[#allocation7 + $0x7d0] sm:$0xff]
    %v329 = vld [vmem:[#allocation7 + $0x7d8] sm:$0xff]
    %v330 = vld [vmem:[#allocation7 + $0x7e0] sm:$0xff]
    %v331 = vld [vmem:[#allocation7 + $0x7e8] sm:$0xff]
    %v332 = vld [vmem:[#allocation7 + $0x7f0] sm:$0xff]
    %v333 = vld [vmem:[#allocation7 + $0x7f8] sm:$0xff]
    %v336 = vunpack.c.l.s4 1966171168
    %v337 = vunpack.c.0.s8 %v336
    %v338 = vlaneseq
    %v339 = vshrl.u32 %v338, 7
    %v340 = vsub.s32 %v337, %v339
    %v341 = vrot.slane %v77, %v340
    %v342 = vcombine.high %v341, %v341
    %v344 = vunpack.c.l.s4 1966171168
    %v345 = vunpack.c.0.s8 %v344
    %v346 = vlaneseq
    %v347 = vshrl.u32 %v346, 7
    %v348 = vsub.s32 %v345, %v347
    %v349 = vrot.slane %v341, %v348
    %v351 = vunpack.c.l.s4 1966171168
    %v352 = vunpack.c.0.s8 %v351
    %v353 = vlaneseq
    %v354 = vshrl.u32 %v353, 7
    %v355 = vsub.s32 %v352, %v354
    %v356 = vrot.slane %v342, %v355
    %v357 = vcombine.high %v349, %v349
    %v358 = vcombine.high %v356, %v356
    %v619 = vunpack.c.l.b16 %v78
    %v620 = vunpack.c.h.b16 %v78
    %v621 = vunpack.c.l.b16 %v79
    %v622 = vunpack.c.h.b16 %v79
    %v623 = vunpack.c.l.b16 %v80
    %v624 = vunpack.c.h.b16 %v80
    %v625 = vunpack.c.l.b16 %v81
    %v626 = vunpack.c.h.b16 %v81
    %v627 = vunpack.c.l.b16 %v82
    %v628 = vunpack.c.h.b16 %v82
    %v629 = vunpack.c.l.b16 %v83
    %v630 = vunpack.c.h.b16 %v83
    %v631 = vunpack.c.l.b16 %v84
    %v632 = vunpack.c.h.b16 %v84
    %v633 = vunpack.c.l.b16 %v85
    %v634 = vunpack.c.h.b16 %v85
    %v635 = vunpack.c.l.b16 %v86
    %v636 = vunpack.c.h.b16 %v86
    %v637 = vunpack.c.l.b16 %v87
    %v638 = vunpack.c.h.b16 %v87
    %v639 = vunpack.c.l.b16 %v88
    %v640 = vunpack.c.h.b16 %v88
    %v641 = vunpack.c.l.b16 %v89
    %v642 = vunpack.c.h.b16 %v89
    %v643 = vunpack.c.l.b16 %v90
    %v644 = vunpack.c.h.b16 %v90
    %v645 = vunpack.c.l.b16 %v91
    %v646 = vunpack.c.h.b16 %v91
    %v647 = vunpack.c.l.b16 %v92
    %v648 = vunpack.c.h.b16 %v92
    %v649 = vunpack.c.l.b16 %v93
    %v650 = vunpack.c.h.b16 %v93
    %v651 = vunpack.c.l.b16 %v94
    %v652 = vunpack.c.h.b16 %v94
    %v653 = vunpack.c.l.b16 %v95
    %v654 = vunpack.c.h.b16 %v95
    %v655 = vunpack.c.l.b16 %v96
    %v656 = vunpack.c.h.b16 %v96
    %v657 = vunpack.c.l.b16 %v97
    %v658 = vunpack.c.h.b16 %v97
    %v659 = vunpack.c.l.b16 %v98
    %v660 = vunpack.c.h.b16 %v98
    %v661 = vunpack.c.l.b16 %v99
    %v662 = vunpack.c.h.b16 %v99
    %v663 = vunpack.c.l.b16 %v100
    %v664 = vunpack.c.h.b16 %v100
    %v665 = vunpack.c.l.b16 %v101
    %v666 = vunpack.c.h.b16 %v101
    %v667 = vunpack.c.l.b16 %v102
    %v668 = vunpack.c.h.b16 %v102
    %v669 = vunpack.c.l.b16 %v103
    %v670 = vunpack.c.h.b16 %v103
    %v671 = vunpack.c.l.b16 %v104
    %v672 = vunpack.c.h.b16 %v104
    %v673 = vunpack.c.l.b16 %v105
    %v674 = vunpack.c.h.b16 %v105
    %v675 = vunpack.c.l.b16 %v106
    %v676 = vunpack.c.h.b16 %v106
    %v677 = vunpack.c.l.b16 %v107
    %v678 = vunpack.c.h.b16 %v107
    %v679 = vunpack.c.l.b16 %v108
    %v680 = vunpack.c.h.b16 %v108
    %v681 = vunpack.c.l.b16 %v109
    %v682 = vunpack.c.h.b16 %v109
    %v683 = vunpack.c.l.b16 %v110
    %v684 = vunpack.c.h.b16 %v110
    %v685 = vunpack.c.l.b16 %v111
    %v686 = vunpack.c.h.b16 %v111
    %v687 = vunpack.c.l.b16 %v112
    %v688 = vunpack.c.h.b16 %v112
    %v689 = vunpack.c.l.b16 %v113
    %v690 = vunpack.c.h.b16 %v113
    %v691 = vunpack.c.l.b16 %v114
    %v692 = vunpack.c.h.b16 %v114
    %v693 = vunpack.c.l.b16 %v115
    %v694 = vunpack.c.h.b16 %v115
    %v695 = vunpack.c.l.b16 %v116
    %v696 = vunpack.c.h.b16 %v116
    %v697 = vunpack.c.l.b16 %v117
    %v698 = vunpack.c.h.b16 %v117
    %v699 = vunpack.c.l.b16 %v118
    %v700 = vunpack.c.h.b16 %v118
    %v701 = vunpack.c.l.b16 %v119
    %v702 = vunpack.c.h.b16 %v119
    %v703 = vunpack.c.l.b16 %v120
    %v704 = vunpack.c.h.b16 %v120
    %v705 = vunpack.c.l.b16 %v121
    %v706 = vunpack.c.h.b16 %v121
    %v707 = vunpack.c.l.b16 %v122
    %v708 = vunpack.c.h.b16 %v122
    %v709 = vunpack.c.l.b16 %v123
    %v710 = vunpack.c.h.b16 %v123
    %v711 = vunpack.c.l.b16 %v124
    %v712 = vunpack.c.h.b16 %v124
    %v713 = vunpack.c.l.b16 %v125
    %v714 = vunpack.c.h.b16 %v125
    %v715 = vunpack.c.l.b16 %v126
    %v716 = vunpack.c.h.b16 %v126
    %v717 = vunpack.c.l.b16 %v127
    %v718 = vunpack.c.h.b16 %v127
    %v719 = vunpack.c.l.b16 %v128
    %v720 = vunpack.c.h.b16 %v128
    %v721 = vunpack.c.l.b16 %v129
    %v722 = vunpack.c.h.b16 %v129
    %v723 = vunpack.c.l.b16 %v130
    %v724 = vunpack.c.h.b16 %v130
    %v725 = vunpack.c.l.b16 %v131
    %v726 = vunpack.c.h.b16 %v131
    %v727 = vunpack.c.l.b16 %v132
    %v728 = vunpack.c.h.b16 %v132
    %v729 = vunpack.c.l.b16 %v133
    %v730 = vunpack.c.h.b16 %v133
    %v731 = vunpack.c.l.b16 %v134
    %v732 = vunpack.c.h.b16 %v134
    %v733 = vunpack.c.l.b16 %v135
    %v734 = vunpack.c.h.b16 %v135
    %v735 = vunpack.c.l.b16 %v136
    %v736 = vunpack.c.h.b16 %v136
    %v737 = vunpack.c.l.b16 %v137
    %v738 = vunpack.c.h.b16 %v137
    %v739 = vunpack.c.l.b16 %v138
    %v740 = vunpack.c.h.b16 %v138
    %v741 = vunpack.c.l.b16 %v139
    %v742 = vunpack.c.h.b16 %v139
    %v743 = vunpack.c.l.b16 %v140
    %v744 = vunpack.c.h.b16 %v140
    %v745 = vunpack.c.l.b16 %v141
    %v746 = vunpack.c.h.b16 %v141
    %v747 = vunpack.c.l.b16 %v142
    %v748 = vunpack.c.h.b16 %v142
    %v749 = vunpack.c.l.b16 %v143
    %v750 = vunpack.c.h.b16 %v143
    %v751 = vunpack.c.l.b16 %v144
    %v752 = vunpack.c.h.b16 %v144
    %v753 = vunpack.c.l.b16 %v145
    %v754 = vunpack.c.h.b16 %v145
    %v755 = vunpack.c.l.b16 %v146
    %v756 = vunpack.c.h.b16 %v146
    %v757 = vunpack.c.l.b16 %v147
    %v758 = vunpack.c.h.b16 %v147
    %v759 = vunpack.c.l.b16 %v148
    %v760 = vunpack.c.h.b16 %v148
    %v761 = vunpack.c.l.b16 %v149
    %v762 = vunpack.c.h.b16 %v149
    %v763 = vunpack.c.l.b16 %v150
    %v764 = vunpack.c.h.b16 %v150
    %v765 = vunpack.c.l.b16 %v151
    %v766 = vunpack.c.h.b16 %v151
    %v767 = vunpack.c.l.b16 %v152
    %v768 = vunpack.c.h.b16 %v152
    %v769 = vunpack.c.l.b16 %v153
    %v770 = vunpack.c.h.b16 %v153
    %v771 = vunpack.c.l.b16 %v154
    %v772 = vunpack.c.h.b16 %v154
    %v773 = vunpack.c.l.b16 %v155
    %v774 = vunpack.c.h.b16 %v155
    %v775 = vunpack.c.l.b16 %v156
    %v776 = vunpack.c.h.b16 %v156
    %v777 = vunpack.c.l.b16 %v157
    %v778 = vunpack.c.h.b16 %v157
    %v779 = vunpack.c.l.b16 %v158
    %v780 = vunpack.c.h.b16 %v158
    %v781 = vunpack.c.l.b16 %v159
    %v782 = vunpack.c.h.b16 %v159
    %v783 = vunpack.c.l.b16 %v160
    %v784 = vunpack.c.h.b16 %v160
    %v785 = vunpack.c.l.b16 %v161
    %v786 = vunpack.c.h.b16 %v161
    %v787 = vunpack.c.l.b16 %v162
    %v788 = vunpack.c.h.b16 %v162
    %v789 = vunpack.c.l.b16 %v163
    %v790 = vunpack.c.h.b16 %v163
    %v791 = vunpack.c.l.b16 %v164
    %v792 = vunpack.c.h.b16 %v164
    %v793 = vunpack.c.l.b16 %v165
    %v794 = vunpack.c.h.b16 %v165
    %v795 = vunpack.c.l.b16 %v166
    %v796 = vunpack.c.h.b16 %v166
    %v797 = vunpack.c.l.b16 %v167
    %v798 = vunpack.c.h.b16 %v167
    %v799 = vunpack.c.l.b16 %v168
    %v800 = vunpack.c.h.b16 %v168
    %v801 = vunpack.c.l.b16 %v169
    %v802 = vunpack.c.h.b16 %v169
    %v803 = vunpack.c.l.b16 %v170
    %v804 = vunpack.c.h.b16 %v170
    %v805 = vunpack.c.l.b16 %v171
    %v806 = vunpack.c.h.b16 %v171
    %v807 = vunpack.c.l.b16 %v172
    %v808 = vunpack.c.h.b16 %v172
    %v809 = vunpack.c.l.b16 %v173
    %v810 = vunpack.c.h.b16 %v173
    %v811 = vunpack.c.l.b16 %v174
    %v812 = vunpack.c.h.b16 %v174
    %v813 = vunpack.c.l.b16 %v175
    %v814 = vunpack.c.h.b16 %v175
    %v815 = vunpack.c.l.b16 %v176
    %v816 = vunpack.c.h.b16 %v176
    %v817 = vunpack.c.l.b16 %v177
    %v818 = vunpack.c.h.b16 %v177
    %v819 = vunpack.c.l.b16 %v178
    %v820 = vunpack.c.h.b16 %v178
    %v821 = vunpack.c.l.b16 %v179
    %v822 = vunpack.c.h.b16 %v179
    %v823 = vunpack.c.l.b16 %v180
    %v824 = vunpack.c.h.b16 %v180
    %v825 = vunpack.c.l.b16 %v181
    %v826 = vunpack.c.h.b16 %v181
    %v827 = vunpack.c.l.b16 %v182
    %v828 = vunpack.c.h.b16 %v182
    %v829 = vunpack.c.l.b16 %v183
    %v830 = vunpack.c.h.b16 %v183
    %v831 = vunpack.c.l.b16 %v184
    %v832 = vunpack.c.h.b16 %v184
    %v833 = vunpack.c.l.b16 %v185
    %v834 = vunpack.c.h.b16 %v185
    %v835 = vunpack.c.l.b16 %v186
    %v836 = vunpack.c.h.b16 %v186
    %v837 = vunpack.c.l.b16 %v187
    %v838 = vunpack.c.h.b16 %v187
    %v839 = vunpack.c.l.b16 %v188
    %v840 = vunpack.c.h.b16 %v188
    %v841 = vunpack.c.l.b16 %v189
    %v842 = vunpack.c.h.b16 %v189
    %v843 = vunpack.c.l.b16 %v190
    %v844 = vunpack.c.h.b16 %v190
    %v845 = vunpack.c.l.b16 %v191
    %v846 = vunpack.c.h.b16 %v191
    %v847 = vunpack.c.l.b16 %v192
    %v848 = vunpack.c.h.b16 %v192
    %v849 = vunpack.c.l.b16 %v193
    %v850 = vunpack.c.h.b16 %v193
    %v851 = vunpack.c.l.b16 %v194
    %v852 = vunpack.c.h.b16 %v194
    %v853 = vunpack.c.l.b16 %v195
    %v854 = vunpack.c.h.b16 %v195
    %v855 = vunpack.c.l.b16 %v196
    %v856 = vunpack.c.h.b16 %v196
    %v857 = vunpack.c.l.b16 %v197
    %v858 = vunpack.c.h.b16 %v197
    %v859 = vunpack.c.l.b16 %v198
    %v860 = vunpack.c.h.b16 %v198
    %v861 = vunpack.c.l.b16 %v199
    %v862 = vunpack.c.h.b16 %v199
    %v863 = vunpack.c.l.b16 %v200
    %v864 = vunpack.c.h.b16 %v200
    %v865 = vunpack.c.l.b16 %v201
    %v866 = vunpack.c.h.b16 %v201
    %v867 = vunpack.c.l.b16 %v202
    %v868 = vunpack.c.h.b16 %v202
    %v869 = vunpack.c.l.b16 %v203
    %v870 = vunpack.c.h.b16 %v203
    %v871 = vunpack.c.l.b16 %v204
    %v872 = vunpack.c.h.b16 %v204
    %v873 = vunpack.c.l.b16 %v205
    %v874 = vunpack.c.h.b16 %v205
    %v875 = vunpack.c.l.b16 %v206
    %v876 = vunpack.c.h.b16 %v206
    %v877 = vunpack.c.l.b16 %v207
    %v878 = vunpack.c.h.b16 %v207
    %v879 = vunpack.c.l.b16 %v208
    %v880 = vunpack.c.h.b16 %v208
    %v881 = vunpack.c.l.b16 %v209
    %v882 = vunpack.c.h.b16 %v209
    %v883 = vunpack.c.l.b16 %v210
    %v884 = vunpack.c.h.b16 %v210
    %v885 = vunpack.c.l.b16 %v211
    %v886 = vunpack.c.h.b16 %v211
    %v887 = vunpack.c.l.b16 %v212
    %v888 = vunpack.c.h.b16 %v212
    %v889 = vunpack.c.l.b16 %v213
    %v890 = vunpack.c.h.b16 %v213
    %v891 = vunpack.c.l.b16 %v214
    %v892 = vunpack.c.h.b16 %v214
    %v893 = vunpack.c.l.b16 %v215
    %v894 = vunpack.c.h.b16 %v215
    %v895 = vunpack.c.l.b16 %v216
    %v896 = vunpack.c.h.b16 %v216
    %v897 = vunpack.c.l.b16 %v217
    %v898 = vunpack.c.h.b16 %v217
    %v899 = vunpack.c.l.b16 %v218
    %v900 = vunpack.c.h.b16 %v218
    %v901 = vunpack.c.l.b16 %v219
    %v902 = vunpack.c.h.b16 %v219
    %v903 = vunpack.c.l.b16 %v220
    %v904 = vunpack.c.h.b16 %v220
    %v905 = vunpack.c.l.b16 %v221
    %v906 = vunpack.c.h.b16 %v221
    %v907 = vunpack.c.l.b16 %v222
    %v908 = vunpack.c.h.b16 %v222
    %v909 = vunpack.c.l.b16 %v223
    %v910 = vunpack.c.h.b16 %v223
    %v911 = vunpack.c.l.b16 %v224
    %v912 = vunpack.c.h.b16 %v224
    %v913 = vunpack.c.l.b16 %v225
    %v914 = vunpack.c.h.b16 %v225
    %v915 = vunpack.c.l.b16 %v226
    %v916 = vunpack.c.h.b16 %v226
    %v917 = vunpack.c.l.b16 %v227
    %v918 = vunpack.c.h.b16 %v227
    %v919 = vunpack.c.l.b16 %v228
    %v920 = vunpack.c.h.b16 %v228
    %v921 = vunpack.c.l.b16 %v229
    %v922 = vunpack.c.h.b16 %v229
    %v923 = vunpack.c.l.b16 %v230
    %v924 = vunpack.c.h.b16 %v230
    %v925 = vunpack.c.l.b16 %v231
    %v926 = vunpack.c.h.b16 %v231
    %v927 = vunpack.c.l.b16 %v232
    %v928 = vunpack.c.h.b16 %v232
    %v929 = vunpack.c.l.b16 %v233
    %v930 = vunpack.c.h.b16 %v233
    %v931 = vunpack.c.l.b16 %v234
    %v932 = vunpack.c.h.b16 %v234
    %v933 = vunpack.c.l.b16 %v235
    %v934 = vunpack.c.h.b16 %v235
    %v935 = vunpack.c.l.b16 %v236
    %v936 = vunpack.c.h.b16 %v236
    %v937 = vunpack.c.l.b16 %v237
    %v938 = vunpack.c.h.b16 %v237
    %v939 = vunpack.c.l.b16 %v238
    %v940 = vunpack.c.h.b16 %v238
    %v941 = vunpack.c.l.b16 %v239
    %v942 = vunpack.c.h.b16 %v239
    %v943 = vunpack.c.l.b16 %v240
    %v944 = vunpack.c.h.b16 %v240
    %v945 = vunpack.c.l.b16 %v241
    %v946 = vunpack.c.h.b16 %v241
    %v947 = vunpack.c.l.b16 %v242
    %v948 = vunpack.c.h.b16 %v242
    %v949 = vunpack.c.l.b16 %v243
    %v950 = vunpack.c.h.b16 %v243
    %v951 = vunpack.c.l.b16 %v244
    %v952 = vunpack.c.h.b16 %v244
    %v953 = vunpack.c.l.b16 %v245
    %v954 = vunpack.c.h.b16 %v245
    %v955 = vunpack.c.l.b16 %v246
    %v956 = vunpack.c.h.b16 %v246
    %v957 = vunpack.c.l.b16 %v247
    %v958 = vunpack.c.h.b16 %v247
    %v959 = vunpack.c.l.b16 %v248
    %v960 = vunpack.c.h.b16 %v248
    %v961 = vunpack.c.l.b16 %v249
    %v962 = vunpack.c.h.b16 %v249
    %v963 = vunpack.c.l.b16 %v250
    %v964 = vunpack.c.h.b16 %v250
    %v965 = vunpack.c.l.b16 %v251
    %v966 = vunpack.c.h.b16 %v251
    %v967 = vunpack.c.l.b16 %v252
    %v968 = vunpack.c.h.b16 %v252
    %v969 = vunpack.c.l.b16 %v253
    %v970 = vunpack.c.h.b16 %v253
    %v971 = vunpack.c.l.b16 %v254
    %v972 = vunpack.c.h.b16 %v254
    %v973 = vunpack.c.l.b16 %v255
    %v974 = vunpack.c.h.b16 %v255
    %v975 = vunpack.c.l.b16 %v256
    %v976 = vunpack.c.h.b16 %v256
    %v977 = vunpack.c.l.b16 %v257
    %v978 = vunpack.c.h.b16 %v257
    %v979 = vunpack.c.l.b16 %v258
    %v980 = vunpack.c.h.b16 %v258
    %v981 = vunpack.c.l.b16 %v259
    %v982 = vunpack.c.h.b16 %v259
    %v983 = vunpack.c.l.b16 %v260
    %v984 = vunpack.c.h.b16 %v260
    %v985 = vunpack.c.l.b16 %v261
    %v986 = vunpack.c.h.b16 %v261
    %v987 = vunpack.c.l.b16 %v262
    %v988 = vunpack.c.h.b16 %v262
    %v989 = vunpack.c.l.b16 %v263
    %v990 = vunpack.c.h.b16 %v263
    %v991 = vunpack.c.l.b16 %v264
    %v992 = vunpack.c.h.b16 %v264
    %v993 = vunpack.c.l.b16 %v265
    %v994 = vunpack.c.h.b16 %v265
    %v995 = vunpack.c.l.b16 %v266
    %v996 = vunpack.c.h.b16 %v266
    %v997 = vunpack.c.l.b16 %v267
    %v998 = vunpack.c.h.b16 %v267
    %v999 = vunpack.c.l.b16 %v268
    %v1000 = vunpack.c.h.b16 %v268
    %v1001 = vunpack.c.l.b16 %v269
    %v1002 = vunpack.c.h.b16 %v269
    %v1003 = vunpack.c.l.b16 %v270
    %v1004 = vunpack.c.h.b16 %v270
    %v1005 = vunpack.c.l.b16 %v271
    %v1006 = vunpack.c.h.b16 %v271
    %v1007 = vunpack.c.l.b16 %v272
    %v1008 = vunpack.c.h.b16 %v272
    %v1009 = vunpack.c.l.b16 %v273
    %v1010 = vunpack.c.h.b16 %v273
    %v1011 = vunpack.c.l.b16 %v274
    %v1012 = vunpack.c.h.b16 %v274
    %v1013 = vunpack.c.l.b16 %v275
    %v1014 = vunpack.c.h.b16 %v275
    %v1015 = vunpack.c.l.b16 %v276
    %v1016 = vunpack.c.h.b16 %v276
    %v1017 = vunpack.c.l.b16 %v277
    %v1018 = vunpack.c.h.b16 %v277
    %v1019 = vunpack.c.l.b16 %v278
    %v1020 = vunpack.c.h.b16 %v278
    %v1021 = vunpack.c.l.b16 %v279
    %v1022 = vunpack.c.h.b16 %v279
    %v1023 = vunpack.c.l.b16 %v280
    %v1024 = vunpack.c.h.b16 %v280
    %v1025 = vunpack.c.l.b16 %v281
    %v1026 = vunpack.c.h.b16 %v281
    %v1027 = vunpack.c.l.b16 %v282
    %v1028 = vunpack.c.h.b16 %v282
    %v1029 = vunpack.c.l.b16 %v283
    %v1030 = vunpack.c.h.b16 %v283
    %v1031 = vunpack.c.l.b16 %v284
    %v1032 = vunpack.c.h.b16 %v284
    %v1033 = vunpack.c.l.b16 %v285
    %v1034 = vunpack.c.h.b16 %v285
    %v1035 = vunpack.c.l.b16 %v286
    %v1036 = vunpack.c.h.b16 %v286
    %v1037 = vunpack.c.l.b16 %v287
    %v1038 = vunpack.c.h.b16 %v287
    %v1039 = vunpack.c.l.b16 %v288
    %v1040 = vunpack.c.h.b16 %v288
    %v1041 = vunpack.c.l.b16 %v289
    %v1042 = vunpack.c.h.b16 %v289
    %v1043 = vunpack.c.l.b16 %v290
    %v1044 = vunpack.c.h.b16 %v290
    %v1045 = vunpack.c.l.b16 %v291
    %v1046 = vunpack.c.h.b16 %v291
    %v1047 = vunpack.c.l.b16 %v292
    %v1048 = vunpack.c.h.b16 %v292
    %v1049 = vunpack.c.l.b16 %v293
    %v1050 = vunpack.c.h.b16 %v293
    %v1051 = vunpack.c.l.b16 %v294
    %v1052 = vunpack.c.h.b16 %v294
    %v1053 = vunpack.c.l.b16 %v295
    %v1054 = vunpack.c.h.b16 %v295
    %v1055 = vunpack.c.l.b16 %v296
    %v1056 = vunpack.c.h.b16 %v296
    %v1057 = vunpack.c.l.b16 %v297
    %v1058 = vunpack.c.h.b16 %v297
    %v1059 = vunpack.c.l.b16 %v298
    %v1060 = vunpack.c.h.b16 %v298
    %v1061 = vunpack.c.l.b16 %v299
    %v1062 = vunpack.c.h.b16 %v299
    %v1063 = vunpack.c.l.b16 %v300
    %v1064 = vunpack.c.h.b16 %v300
    %v1065 = vunpack.c.l.b16 %v301
    %v1066 = vunpack.c.h.b16 %v301
    %v1067 = vunpack.c.l.b16 %v302
    %v1068 = vunpack.c.h.b16 %v302
    %v1069 = vunpack.c.l.b16 %v303
    %v1070 = vunpack.c.h.b16 %v303
    %v1071 = vunpack.c.l.b16 %v304
    %v1072 = vunpack.c.h.b16 %v304
    %v1073 = vunpack.c.l.b16 %v305
    %v1074 = vunpack.c.h.b16 %v305
    %v1075 = vunpack.c.l.b16 %v306
    %v1076 = vunpack.c.h.b16 %v306
    %v1077 = vunpack.c.l.b16 %v307
    %v1078 = vunpack.c.h.b16 %v307
    %v1079 = vunpack.c.l.b16 %v308
    %v1080 = vunpack.c.h.b16 %v308
    %v1081 = vunpack.c.l.b16 %v309
    %v1082 = vunpack.c.h.b16 %v309
    %v1083 = vunpack.c.l.b16 %v310
    %v1084 = vunpack.c.h.b16 %v310
    %v1085 = vunpack.c.l.b16 %v311
    %v1086 = vunpack.c.h.b16 %v311
    %v1087 = vunpack.c.l.b16 %v312
    %v1088 = vunpack.c.h.b16 %v312
    %v1089 = vunpack.c.l.b16 %v313
    %v1090 = vunpack.c.h.b16 %v313
    %v1091 = vunpack.c.l.b16 %v314
    %v1092 = vunpack.c.h.b16 %v314
    %v1093 = vunpack.c.l.b16 %v315
    %v1094 = vunpack.c.h.b16 %v315
    %v1095 = vunpack.c.l.b16 %v316
    %v1096 = vunpack.c.h.b16 %v316
    %v1097 = vunpack.c.l.b16 %v317
    %v1098 = vunpack.c.h.b16 %v317
    %v1099 = vunpack.c.l.b16 %v318
    %v1100 = vunpack.c.h.b16 %v318
    %v1101 = vunpack.c.l.b16 %v319
    %v1102 = vunpack.c.h.b16 %v319
    %v1103 = vunpack.c.l.b16 %v320
    %v1104 = vunpack.c.h.b16 %v320
    %v1105 = vunpack.c.l.b16 %v321
    %v1106 = vunpack.c.h.b16 %v321
    %v1107 = vunpack.c.l.b16 %v322
    %v1108 = vunpack.c.h.b16 %v322
    %v1109 = vunpack.c.l.b16 %v323
    %v1110 = vunpack.c.h.b16 %v323
    %v1111 = vunpack.c.l.b16 %v324
    %v1112 = vunpack.c.h.b16 %v324
    %v1113 = vunpack.c.l.b16 %v325
    %v1114 = vunpack.c.h.b16 %v325
    %v1115 = vunpack.c.l.b16 %v326
    %v1116 = vunpack.c.h.b16 %v326
    %v1117 = vunpack.c.l.b16 %v327
    %v1118 = vunpack.c.h.b16 %v327
    %v1119 = vunpack.c.l.b16 %v328
    %v1120 = vunpack.c.h.b16 %v328
    %v1121 = vunpack.c.l.b16 %v329
    %v1122 = vunpack.c.h.b16 %v329
    %v1123 = vunpack.c.l.b16 %v330
    %v1124 = vunpack.c.h.b16 %v330
    %v1125 = vunpack.c.l.b16 %v331
    %v1126 = vunpack.c.h.b16 %v331
    %v1127 = vunpack.c.l.b16 %v332
    %v1128 = vunpack.c.h.b16 %v332
    %v1129 = vunpack.c.l.b16 %v333
    %v1130 = vunpack.c.h.b16 %v333
    %v1131 = vpack.c.b16 %v627, %v619
    %v1132 = vpack.c.b16 %v628, %v620
    %v1133 = vpack.c.b16 %v629, %v621
    %v1134 = vpack.c.b16 %v630, %v622
    %v1135 = vpack.c.b16 %v631, %v623
    %v1136 = vpack.c.b16 %v632, %v624
    %v1137 = vpack.c.b16 %v633, %v625
    %v1138 = vpack.c.b16 %v634, %v626
    %v1139 = vpack.c.b16 %v643, %v635
    %v1140 = vpack.c.b16 %v644, %v636
    %v1141 = vpack.c.b16 %v645, %v637
    %v1142 = vpack.c.b16 %v646, %v638
    %v1143 = vpack.c.b16 %v647, %v639
    %v1144 = vpack.c.b16 %v648, %v640
    %v1145 = vpack.c.b16 %v649, %v641
    %v1146 = vpack.c.b16 %v650, %v642
    %v1147 = vpack.c.b16 %v659, %v651
    %v1148 = vpack.c.b16 %v660, %v652
    %v1149 = vpack.c.b16 %v661, %v653
    %v1150 = vpack.c.b16 %v662, %v654
    %v1151 = vpack.c.b16 %v663, %v655
    %v1152 = vpack.c.b16 %v664, %v656
    %v1153 = vpack.c.b16 %v665, %v657
    %v1154 = vpack.c.b16 %v666, %v658
    %v1155 = vpack.c.b16 %v675, %v667
    %v1156 = vpack.c.b16 %v676, %v668
    %v1157 = vpack.c.b16 %v677, %v669
    %v1158 = vpack.c.b16 %v678, %v670
    %v1159 = vpack.c.b16 %v679, %v671
    %v1160 = vpack.c.b16 %v680, %v672
    %v1161 = vpack.c.b16 %v681, %v673
    %v1162 = vpack.c.b16 %v682, %v674
    %v1163 = vpack.c.b16 %v691, %v683
    %v1164 = vpack.c.b16 %v692, %v684
    %v1165 = vpack.c.b16 %v693, %v685
    %v1166 = vpack.c.b16 %v694, %v686
    %v1167 = vpack.c.b16 %v695, %v687
    %v1168 = vpack.c.b16 %v696, %v688
    %v1169 = vpack.c.b16 %v697, %v689
    %v1170 = vpack.c.b16 %v698, %v690
    %v1171 = vpack.c.b16 %v707, %v699
    %v1172 = vpack.c.b16 %v708, %v700
    %v1173 = vpack.c.b16 %v709, %v701
    %v1174 = vpack.c.b16 %v710, %v702
    %v1175 = vpack.c.b16 %v711, %v703
    %v1176 = vpack.c.b16 %v712, %v704
    %v1177 = vpack.c.b16 %v713, %v705
    %v1178 = vpack.c.b16 %v714, %v706
    %v1179 = vpack.c.b16 %v723, %v715
    %v1180 = vpack.c.b16 %v724, %v716
    %v1181 = vpack.c.b16 %v725, %v717
    %v1182 = vpack.c.b16 %v726, %v718
    %v1183 = vpack.c.b16 %v727, %v719
    %v1184 = vpack.c.b16 %v728, %v720
    %v1185 = vpack.c.b16 %v729, %v721
    %v1186 = vpack.c.b16 %v730, %v722
    %v1187 = vpack.c.b16 %v739, %v731
    %v1188 = vpack.c.b16 %v740, %v732
    %v1189 = vpack.c.b16 %v741, %v733
    %v1190 = vpack.c.b16 %v742, %v734
    %v1191 = vpack.c.b16 %v743, %v735
    %v1192 = vpack.c.b16 %v744, %v736
    %v1193 = vpack.c.b16 %v745, %v737
    %v1194 = vpack.c.b16 %v746, %v738
    %v1195 = vpack.c.b16 %v755, %v747
    %v1196 = vpack.c.b16 %v756, %v748
    %v1197 = vpack.c.b16 %v757, %v749
    %v1198 = vpack.c.b16 %v758, %v750
    %v1199 = vpack.c.b16 %v759, %v751
    %v1200 = vpack.c.b16 %v760, %v752
    %v1201 = vpack.c.b16 %v761, %v753
    %v1202 = vpack.c.b16 %v762, %v754
    %v1203 = vpack.c.b16 %v771, %v763
    %v1204 = vpack.c.b16 %v772, %v764
    %v1205 = vpack.c.b16 %v773, %v765
    %v1206 = vpack.c.b16 %v774, %v766
    %v1207 = vpack.c.b16 %v775, %v767
    %v1208 = vpack.c.b16 %v776, %v768
    %v1209 = vpack.c.b16 %v777, %v769
    %v1210 = vpack.c.b16 %v778, %v770
    %v1211 = vpack.c.b16 %v787, %v779
    %v1212 = vpack.c.b16 %v788, %v780
    %v1213 = vpack.c.b16 %v789, %v781
    %v1214 = vpack.c.b16 %v790, %v782
    %v1215 = vpack.c.b16 %v791, %v783
    %v1216 = vpack.c.b16 %v792, %v784
    %v1217 = vpack.c.b16 %v793, %v785
    %v1218 = vpack.c.b16 %v794, %v786
    %v1219 = vpack.c.b16 %v803, %v795
    %v1220 = vpack.c.b16 %v804, %v796
    %v1221 = vpack.c.b16 %v805, %v797
    %v1222 = vpack.c.b16 %v806, %v798
    %v1223 = vpack.c.b16 %v807, %v799
    %v1224 = vpack.c.b16 %v808, %v800
    %v1225 = vpack.c.b16 %v809, %v801
    %v1226 = vpack.c.b16 %v810, %v802
    %v1227 = vpack.c.b16 %v819, %v811
    %v1228 = vpack.c.b16 %v820, %v812
    %v1229 = vpack.c.b16 %v821, %v813
    %v1230 = vpack.c.b16 %v822, %v814
    %v1231 = vpack.c.b16 %v823, %v815
    %v1232 = vpack.c.b16 %v824, %v816
    %v1233 = vpack.c.b16 %v825, %v817
    %v1234 = vpack.c.b16 %v826, %v818
    %v1235 = vpack.c.b16 %v835, %v827
    %v1236 = vpack.c.b16 %v836, %v828
    %v1237 = vpack.c.b16 %v837, %v829
    %v1238 = vpack.c.b16 %v838, %v830
    %v1239 = vpack.c.b16 %v839, %v831
    %v1240 = vpack.c.b16 %v840, %v832
    %v1241 = vpack.c.b16 %v841, %v833
    %v1242 = vpack.c.b16 %v842, %v834
    %v1243 = vpack.c.b16 %v851, %v843
    %v1244 = vpack.c.b16 %v852, %v844
    %v1245 = vpack.c.b16 %v853, %v845
    %v1246 = vpack.c.b16 %v854, %v846
    %v1247 = vpack.c.b16 %v855, %v847
    %v1248 = vpack.c.b16 %v856, %v848
    %v1249 = vpack.c.b16 %v857, %v849
    %v1250 = vpack.c.b16 %v858, %v850
    %v1251 = vpack.c.b16 %v867, %v859
    %v1252 = vpack.c.b16 %v868, %v860
    %v1253 = vpack.c.b16 %v869, %v861
    %v1254 = vpack.c.b16 %v870, %v862
    %v1255 = vpack.c.b16 %v871, %v863
    %v1256 = vpack.c.b16 %v872, %v864
    %v1257 = vpack.c.b16 %v873, %v865
    %v1258 = vpack.c.b16 %v874, %v866
    %v1259 = vpack.c.b16 %v883, %v875
    %v1260 = vpack.c.b16 %v884, %v876
    %v1261 = vpack.c.b16 %v885, %v877
    %v1262 = vpack.c.b16 %v886, %v878
    %v1263 = vpack.c.b16 %v887, %v879
    %v1264 = vpack.c.b16 %v888, %v880
    %v1265 = vpack.c.b16 %v889, %v881
    %v1266 = vpack.c.b16 %v890, %v882
    %v1267 = vpack.c.b16 %v899, %v891
    %v1268 = vpack.c.b16 %v900, %v892
    %v1269 = vpack.c.b16 %v901, %v893
    %v1270 = vpack.c.b16 %v902, %v894
    %v1271 = vpack.c.b16 %v903, %v895
    %v1272 = vpack.c.b16 %v904, %v896
    %v1273 = vpack.c.b16 %v905, %v897
    %v1274 = vpack.c.b16 %v906, %v898
    %v1275 = vpack.c.b16 %v915, %v907
    %v1276 = vpack.c.b16 %v916, %v908
    %v1277 = vpack.c.b16 %v917, %v909
    %v1278 = vpack.c.b16 %v918, %v910
    %v1279 = vpack.c.b16 %v919, %v911
    %v1280 = vpack.c.b16 %v920, %v912
    %v1281 = vpack.c.b16 %v921, %v913
    %v1282 = vpack.c.b16 %v922, %v914
    %v1283 = vpack.c.b16 %v931, %v923
    %v1284 = vpack.c.b16 %v932, %v924
    %v1285 = vpack.c.b16 %v933, %v925
    %v1286 = vpack.c.b16 %v934, %v926
    %v1287 = vpack.c.b16 %v935, %v927
    %v1288 = vpack.c.b16 %v936, %v928
    %v1289 = vpack.c.b16 %v937, %v929
    %v1290 = vpack.c.b16 %v938, %v930
    %v1291 = vpack.c.b16 %v947, %v939
    %v1292 = vpack.c.b16 %v948, %v940
    %v1293 = vpack.c.b16 %v949, %v941
    %v1294 = vpack.c.b16 %v950, %v942
    %v1295 = vpack.c.b16 %v951, %v943
    %v1296 = vpack.c.b16 %v952, %v944
    %v1297 = vpack.c.b16 %v953, %v945
    %v1298 = vpack.c.b16 %v954, %v946
    %v1299 = vpack.c.b16 %v963, %v955
    %v1300 = vpack.c.b16 %v964, %v956
    %v1301 = vpack.c.b16 %v965, %v957
    %v1302 = vpack.c.b16 %v966, %v958
    %v1303 = vpack.c.b16 %v967, %v959
    %v1304 = vpack.c.b16 %v968, %v960
    %v1305 = vpack.c.b16 %v969, %v961
    %v1306 = vpack.c.b16 %v970, %v962
    %v1307 = vpack.c.b16 %v979, %v971
    %v1308 = vpack.c.b16 %v980, %v972
    %v1309 = vpack.c.b16 %v981, %v973
    %v1310 = vpack.c.b16 %v982, %v974
    %v1311 = vpack.c.b16 %v983, %v975
    %v1312 = vpack.c.b16 %v984, %v976
    %v1313 = vpack.c.b16 %v985, %v977
    %v1314 = vpack.c.b16 %v986, %v978
    %v1315 = vpack.c.b16 %v995, %v987
    %v1316 = vpack.c.b16 %v996, %v988
    %v1317 = vpack.c.b16 %v997, %v989
    %v1318 = vpack.c.b16 %v998, %v990
    %v1319 = vpack.c.b16 %v999, %v991
    %v1320 = vpack.c.b16 %v1000, %v992
    %v1321 = vpack.c.b16 %v1001, %v993
    %v1322 = vpack.c.b16 %v1002, %v994
    %v1323 = vpack.c.b16 %v1011, %v1003
    %v1324 = vpack.c.b16 %v1012, %v1004
    %v1325 = vpack.c.b16 %v1013, %v1005
    %v1326 = vpack.c.b16 %v1014, %v1006
    %v1327 = vpack.c.b16 %v1015, %v1007
    %v1328 = vpack.c.b16 %v1016, %v1008
    %v1329 = vpack.c.b16 %v1017, %v1009
    %v1330 = vpack.c.b16 %v1018, %v1010
    %v1331 = vpack.c.b16 %v1027, %v1019
    %v1332 = vpack.c.b16 %v1028, %v1020
    %v1333 = vpack.c.b16 %v1029, %v1021
    %v1334 = vpack.c.b16 %v1030, %v1022
    %v1335 = vpack.c.b16 %v1031, %v1023
    %v1336 = vpack.c.b16 %v1032, %v1024
    %v1337 = vpack.c.b16 %v1033, %v1025
    %v1338 = vpack.c.b16 %v1034, %v1026
    %v1339 = vpack.c.b16 %v1043, %v1035
    %v1340 = vpack.c.b16 %v1044, %v1036
    %v1341 = vpack.c.b16 %v1045, %v1037
    %v1342 = vpack.c.b16 %v1046, %v1038
    %v1343 = vpack.c.b16 %v1047, %v1039
    %v1344 = vpack.c.b16 %v1048, %v1040
    %v1345 = vpack.c.b16 %v1049, %v1041
    %v1346 = vpack.c.b16 %v1050, %v1042
    %v1347 = vpack.c.b16 %v1059, %v1051
    %v1348 = vpack.c.b16 %v1060, %v1052
    %v1349 = vpack.c.b16 %v1061, %v1053
    %v1350 = vpack.c.b16 %v1062, %v1054
    %v1351 = vpack.c.b16 %v1063, %v1055
    %v1352 = vpack.c.b16 %v1064, %v1056
    %v1353 = vpack.c.b16 %v1065, %v1057
    %v1354 = vpack.c.b16 %v1066, %v1058
    %v1355 = vpack.c.b16 %v1075, %v1067
    %v1356 = vpack.c.b16 %v1076, %v1068
    %v1357 = vpack.c.b16 %v1077, %v1069
    %v1358 = vpack.c.b16 %v1078, %v1070
    %v1359 = vpack.c.b16 %v1079, %v1071
    %v1360 = vpack.c.b16 %v1080, %v1072
    %v1361 = vpack.c.b16 %v1081, %v1073
    %v1362 = vpack.c.b16 %v1082, %v1074
    %v1363 = vpack.c.b16 %v1091, %v1083
    %v1364 = vpack.c.b16 %v1092, %v1084
    %v1365 = vpack.c.b16 %v1093, %v1085
    %v1366 = vpack.c.b16 %v1094, %v1086
    %v1367 = vpack.c.b16 %v1095, %v1087
    %v1368 = vpack.c.b16 %v1096, %v1088
    %v1369 = vpack.c.b16 %v1097, %v1089
    %v1370 = vpack.c.b16 %v1098, %v1090
    %v1371 = vpack.c.b16 %v1107, %v1099
    %v1372 = vpack.c.b16 %v1108, %v1100
    %v1373 = vpack.c.b16 %v1109, %v1101
    %v1374 = vpack.c.b16 %v1110, %v1102
    %v1375 = vpack.c.b16 %v1111, %v1103
    %v1376 = vpack.c.b16 %v1112, %v1104
    %v1377 = vpack.c.b16 %v1113, %v1105
    %v1378 = vpack.c.b16 %v1114, %v1106
    %v1379 = vpack.c.b16 %v1123, %v1115
    %v1380 = vpack.c.b16 %v1124, %v1116
    %v1381 = vpack.c.b16 %v1125, %v1117
    %v1382 = vpack.c.b16 %v1126, %v1118
    %v1383 = vpack.c.b16 %v1127, %v1119
    %v1384 = vpack.c.b16 %v1128, %v1120
    %v1385 = vpack.c.b16 %v1129, %v1121
    %v1386 = vpack.c.b16 %v1130, %v1122
    %1643 = vmatprep.subr.bf16.mxu0 %v1132
    %1644 = vmatpush1.bf16.msra.mxu0 %v1131
    %1645 = vmatprep.subr.bf16.mxu0 %v1140
    %1646 = vmatpush1.bf16.msra.mxu0 %v1139
    %1647 = vmatprep.subr.bf16.mxu0 %v1148
    %1648 = vmatpush1.bf16.msra.mxu0 %v1147
    %1649 = vmatprep.subr.bf16.mxu0 %v1156
    %1650 = vmatpush1.bf16.msra.mxu0 %v1155
    %1651 = vmatprep.subr.bf16.mxu0 %v1164
    %1652 = vmatpush1.bf16.msra.mxu0 %v1163
    %1653 = vmatprep.subr.bf16.mxu0 %v1172
    %1654 = vmatpush1.bf16.msra.mxu0 %v1171
    %1655 = vmatprep.subr.bf16.mxu0 %v1180
    %1656 = vmatpush1.bf16.msra.mxu0 %v1179
    %1657 = vmatprep.subr.bf16.mxu0 %v1188
    %1658 = vmatpush1.bf16.msra.mxu0 %v1187
    %1659 = vmatprep.subr.bf16.mxu0 %v1196
    %1660 = vmatpush1.bf16.msra.mxu0 %v1195
    %1661 = vmatprep.subr.bf16.mxu0 %v1204
    %1662 = vmatpush1.bf16.msra.mxu0 %v1203
    %1663 = vmatprep.subr.bf16.mxu0 %v1212
    %1664 = vmatpush1.bf16.msra.mxu0 %v1211
    %1665 = vmatprep.subr.bf16.mxu0 %v1220
    %1666 = vmatpush1.bf16.msra.mxu0 %v1219
    %1667 = vmatprep.subr.bf16.mxu0 %v1228
    %1668 = vmatpush1.bf16.msra.mxu0 %v1227
    %1669 = vmatprep.subr.bf16.mxu0 %v1236
    %1670 = vmatpush1.bf16.msra.mxu0 %v1235
    %1671 = vmatprep.subr.bf16.mxu0 %v1244
    %1672 = vmatpush1.bf16.msra.mxu0 %v1243
    %1673 = vmatprep.subr.bf16.mxu0 %v1252
    %1674 = vmatpush1.bf16.msra.mxu0 %v1251
    %1675 = vmatprep.mubr.bf16.mxu0 %v356
    %1676 = vmatmul.mubr.bf16.gmra.mrb[0].mxu0 %v349
    %v1677 = vpop.f32.mrb[0].mxu0
    %v1678 = vadd.f32 0.0, %v1677
    %v1679 = vpop.f32.mrb[0].mxu0
    %v1680 = vadd.f32 0.0, %v1679
    %v1681 = vpop.f32.mrb[0].mxu0
    %v1682 = vpop.f32.mrb[0].mxu0
    %1683 = vdwg.mxu0
    %1684 = vmatprep.subr.bf16.mxu0 %v1260
    %1685 = vmatpush1.bf16.msra.mxu0 %v1259
    %1686 = vmatprep.subr.bf16.mxu0 %v1268
    %1687 = vmatpush1.bf16.msra.mxu0 %v1267
    %1688 = vmatprep.subr.bf16.mxu0 %v1276
    %1689 = vmatpush1.bf16.msra.mxu0 %v1275
    %1690 = vmatprep.subr.bf16.mxu0 %v1284
    %1691 = vmatpush1.bf16.msra.mxu0 %v1283
    %1692 = vmatprep.subr.bf16.mxu0 %v1292
    %1693 = vmatpush1.bf16.msra.mxu0 %v1291
    %1694 = vmatprep.subr.bf16.mxu0 %v1300
    %1695 = vmatpush1.bf16.msra.mxu0 %v1299
    %1696 = vmatprep.subr.bf16.mxu0 %v1308
    %1697 = vmatpush1.bf16.msra.mxu0 %v1307
    %1698 = vmatprep.subr.bf16.mxu0 %v1316
    %1699 = vmatpush1.bf16.msra.mxu0 %v1315
    %1700 = vmatprep.subr.bf16.mxu0 %v1324
    %1701 = vmatpush1.bf16.msra.mxu0 %v1323
    %1702 = vmatprep.subr.bf16.mxu0 %v1332
    %1703 = vmatpush1.bf16.msra.mxu0 %v1331
    %1704 = vmatprep.subr.bf16.mxu0 %v1340
    %1705 = vmatpush1.bf16.msra.mxu0 %v1339
    %1706 = vmatprep.subr.bf16.mxu0 %v1348
    %1707 = vmatpush1.bf16.msra.mxu0 %v1347
    %1708 = vmatprep.subr.bf16.mxu0 %v1356
    %1709 = vmatpush1.bf16.msra.mxu0 %v1355
    %1710 = vmatprep.subr.bf16.mxu0 %v1364
    %1711 = vmatpush1.bf16.msra.mxu0 %v1363
    %1712 = vmatprep.subr.bf16.mxu0 %v1372
    %1713 = vmatpush1.bf16.msra.mxu0 %v1371
    %1714 = vmatprep.subr.bf16.mxu0 %v1380
    %1715 = vmatpush1.bf16.msra.mxu0 %v1379
    %1716 = vmatprep.mubr.bf16.mxu0 %v358
    %1717 = vmatmul.mubr.bf16.gmra.mrb[0].mxu0 %v357
    %v1718 = vpop.f32.mrb[0].mxu0
    %v1719 = vadd.f32 %v1678, %v1718
    %v1720 = vpop.f32.mrb[0].mxu0
    %v1721 = vadd.f32 %v1680, %v1720
    %v1722 = vpop.f32.mrb[0].mxu0
    %v1723 = vpop.f32.mrb[0].mxu0
    %1724 = vdwg.mxu0
    %1725 = vmatprep.subr.bf16.mxu0 %v1134
    %1726 = vmatpush1.bf16.msra.mxu0 %v1133
    %1727 = vmatprep.subr.bf16.mxu0 %v1142
    %1728 = vmatpush1.bf16.msra.mxu0 %v1141
    %1729 = vmatprep.subr.bf16.mxu0 %v1150
    %1730 = vmatpush1.bf16.msra.mxu0 %v1149
    %1731 = vmatprep.subr.bf16.mxu0 %v1158
    %1732 = vmatpush1.bf16.msra.mxu0 %v1157
    %1733 = vmatprep.subr.bf16.mxu0 %v1166
    %1734 = vmatpush1.bf16.msra.mxu0 %v1165
    %1735 = vmatprep.subr.bf16.mxu0 %v1174
    %1736 = vmatpush1.bf16.msra.mxu0 %v1173
    %1737 = vmatprep.subr.bf16.mxu0 %v1182
    %1738 = vmatpush1.bf16.msra.mxu0 %v1181
    %1739 = vmatprep.subr.bf16.mxu0 %v1190
    %1740 = vmatpush1.bf16.msra.mxu0 %v1189
    %1741 = vmatprep.subr.bf16.mxu0 %v1198
    %1742 = vmatpush1.bf16.msra.mxu0 %v1197
    %1743 = vmatprep.subr.bf16.mxu0 %v1206
    %1744 = vmatpush1.bf16.msra.mxu0 %v1205
    %1745 = vmatprep.subr.bf16.mxu0 %v1214
    %1746 = vmatpush1.bf16.msra.mxu0 %v1213
    %1747 = vmatprep.subr.bf16.mxu0 %v1222
    %1748 = vmatpush1.bf16.msra.mxu0 %v1221
    %1749 = vmatprep.subr.bf16.mxu0 %v1230
    %1750 = vmatpush1.bf16.msra.mxu0 %v1229
    %1751 = vmatprep.subr.bf16.mxu0 %v1238
    %1752 = vmatpush1.bf16.msra.mxu0 %v1237
    %1753 = vmatprep.subr.bf16.mxu0 %v1246
    %1754 = vmatpush1.bf16.msra.mxu0 %v1245
    %1755 = vmatprep.subr.bf16.mxu0 %v1254
    %1756 = vmatpush1.bf16.msra.mxu0 %v1253
    %1757 = vmatprep.mubr.bf16.mxu0 %v356
    %1758 = vmatmul.mubr.bf16.gmra.mrb[0].mxu0 %v349
    %v1759 = vpop.f32.mrb[0].mxu0
    %v1760 = vadd.f32 0.0, %v1759
    %v1761 = vpop.f32.mrb[0].mxu0
    %v1762 = vadd.f32 0.0, %v1761
    %v1763 = vpop.f32.mrb[0].mxu0
    %v1764 = vpop.f32.mrb[0].mxu0
    %1765 = vdwg.mxu0
    %1766 = vmatprep.subr.bf16.mxu0 %v1262
    %1767 = vmatpush1.bf16.msra.mxu0 %v1261
    %1768 = vmatprep.subr.bf16.mxu0 %v1270
    %1769 = vmatpush1.bf16.msra.mxu0 %v1269
    %1770 = vmatprep.subr.bf16.mxu0 %v1278
    %1771 = vmatpush1.bf16.msra.mxu0 %v1277
    %1772 = vmatprep.subr.bf16.mxu0 %v1286
    %1773 = vmatpush1.bf16.msra.mxu0 %v1285
    %1774 = vmatprep.subr.bf16.mxu0 %v1294
    %1775 = vmatpush1.bf16.msra.mxu0 %v1293
    %1776 = vmatprep.subr.bf16.mxu0 %v1302
    %1777 = vmatpush1.bf16.msra.mxu0 %v1301
    %1778 = vmatprep.subr.bf16.mxu0 %v1310
    %1779 = vmatpush1.bf16.msra.mxu0 %v1309
    %1780 = vmatprep.subr.bf16.mxu0 %v1318
    %1781 = vmatpush1.bf16.msra.mxu0 %v1317
    %1782 = vmatprep.subr.bf16.mxu0 %v1326
    %1783 = vmatpush1.bf16.msra.mxu0 %v1325
    %1784 = vmatprep.subr.bf16.mxu0 %v1334
    %1785 = vmatpush1.bf16.msra.mxu0 %v1333
    %1786 = vmatprep.subr.bf16.mxu0 %v1342
    %1787 = vmatpush1.bf16.msra.mxu0 %v1341
    %1788 = vmatprep.subr.bf16.mxu0 %v1350
    %1789 = vmatpush1.bf16.msra.mxu0 %v1349
    %1790 = vmatprep.subr.bf16.mxu0 %v1358
    %1791 = vmatpush1.bf16.msra.mxu0 %v1357
    %1792 = vmatprep.subr.bf16.mxu0 %v1366
    %1793 = vmatpush1.bf16.msra.mxu0 %v1365
    %1794 = vmatprep.subr.bf16.mxu0 %v1374
    %1795 = vmatpush1.bf16.msra.mxu0 %v1373
    %1796 = vmatprep.subr.bf16.mxu0 %v1382
    %1797 = vmatpush1.bf16.msra.mxu0 %v1381
    %1798 = vmatprep.mubr.bf16.mxu0 %v358
    %1799 = vmatmul.mubr.bf16.gmra.mrb[0].mxu0 %v357
    %v1800 = vpop.f32.mrb[0].mxu0
    %v1801 = vadd.f32 %v1760, %v1800
    %v1802 = vpop.f32.mrb[0].mxu0
    %v1803 = vadd.f32 %v1762, %v1802
    %v1804 = vpop.f32.mrb[0].mxu0
    %v1805 = vpop.f32.mrb[0].mxu0
    %1806 = vdwg.mxu0
    %1807 = vmatprep.subr.bf16.mxu0 %v1136
    %1808 = vmatpush1.bf16.msra.mxu0 %v1135
    %1809 = vmatprep.subr.bf16.mxu0 %v1144
    %1810 = vmatpush1.bf16.msra.mxu0 %v1143
    %1811 = vmatprep.subr.bf16.mxu0 %v1152
    %1812 = vmatpush1.bf16.msra.mxu0 %v1151
    %1813 = vmatprep.subr.bf16.mxu0 %v1160
    %1814 = vmatpush1.bf16.msra.mxu0 %v1159
    %1815 = vmatprep.subr.bf16.mxu0 %v1168
    %1816 = vmatpush1.bf16.msra.mxu0 %v1167
    %1817 = vmatprep.subr.bf16.mxu0 %v1176
    %1818 = vmatpush1.bf16.msra.mxu0 %v1175
    %1819 = vmatprep.subr.bf16.mxu0 %v1184
    %1820 = vmatpush1.bf16.msra.mxu0 %v1183
    %1821 = vmatprep.subr.bf16.mxu0 %v1192
    %1822 = vmatpush1.bf16.msra.mxu0 %v1191
    %1823 = vmatprep.subr.bf16.mxu0 %v1200
    %1824 = vmatpush1.bf16.msra.mxu0 %v1199
    %1825 = vmatprep.subr.bf16.mxu0 %v1208
    %1826 = vmatpush1.bf16.msra.mxu0 %v1207
    %1827 = vmatprep.subr.bf16.mxu0 %v1216
    %1828 = vmatpush1.bf16.msra.mxu0 %v1215
    %1829 = vmatprep.subr.bf16.mxu0 %v1224
    %1830 = vmatpush1.bf16.msra.mxu0 %v1223
    %1831 = vmatprep.subr.bf16.mxu0 %v1232
    %1832 = vmatpush1.bf16.msra.mxu0 %v1231
    %1833 = vmatprep.subr.bf16.mxu0 %v1240
    %1834 = vmatpush1.bf16.msra.mxu0 %v1239
    %1835 = vmatprep.subr.bf16.mxu0 %v1248
    %1836 = vmatpush1.bf16.msra.mxu0 %v1247
    %1837 = vmatprep.subr.bf16.mxu0 %v1256
    %1838 = vmatpush1.bf16.msra.mxu0 %v1255
    %1839 = vmatprep.mubr.bf16.mxu0 %v356
    %1840 = vmatmul.mubr.bf16.gmra.mrb[0].mxu0 %v349
    %v1841 = vpop.f32.mrb[0].mxu0
    %v1842 = vadd.f32 0.0, %v1841
    %v1843 = vpop.f32.mrb[0].mxu0
    %v1844 = vadd.f32 0.0, %v1843
    %v1845 = vpop.f32.mrb[0].mxu0
    %v1846 = vpop.f32.mrb[0].mxu0
    %1847 = vdwg.mxu0
    %1848 = vmatprep.subr.bf16.mxu0 %v1264
    %1849 = vmatpush1.bf16.msra.mxu0 %v1263
    %1850 = vmatprep.subr.bf16.mxu0 %v1272
    %1851 = vmatpush1.bf16.msra.mxu0 %v1271
    %1852 = vmatprep.subr.bf16.mxu0 %v1280
    %1853 = vmatpush1.bf16.msra.mxu0 %v1279
    %1854 = vmatprep.subr.bf16.mxu0 %v1288
    %1855 = vmatpush1.bf16.msra.mxu0 %v1287
    %1856 = vmatprep.subr.bf16.mxu0 %v1296
    %1857 = vmatpush1.bf16.msra.mxu0 %v1295
    %1858 = vmatprep.subr.bf16.mxu0 %v1304
    %1859 = vmatpush1.bf16.msra.mxu0 %v1303
    %1860 = vmatprep.subr.bf16.mxu0 %v1312
    %1861 = vmatpush1.bf16.msra.mxu0 %v1311
    %1862 = vmatprep.subr.bf16.mxu0 %v1320
    %1863 = vmatpush1.bf16.msra.mxu0 %v1319
    %1864 = vmatprep.subr.bf16.mxu0 %v1328
    %1865 = vmatpush1.bf16.msra.mxu0 %v1327
    %1866 = vmatprep.subr.bf16.mxu0 %v1336
    %1867 = vmatpush1.bf16.msra.mxu0 %v1335
    %1868 = vmatprep.subr.bf16.mxu0 %v1344
    %1869 = vmatpush1.bf16.msra.mxu0 %v1343
    %1870 = vmatprep.subr.bf16.mxu0 %v1352
    %1871 = vmatpush1.bf16.msra.mxu0 %v1351
    %1872 = vmatprep.subr.bf16.mxu0 %v1360
    %1873 = vmatpush1.bf16.msra.mxu0 %v1359
    %1874 = vmatprep.subr.bf16.mxu0 %v1368
    %1875 = vmatpush1.bf16.msra.mxu0 %v1367
    %1876 = vmatprep.subr.bf16.mxu0 %v1376
    %1877 = vmatpush1.bf16.msra.mxu0 %v1375
    %1878 = vmatprep.subr.bf16.mxu0 %v1384
    %1879 = vmatpush1.bf16.msra.mxu0 %v1383
    %1880 = vmatprep.mubr.bf16.mxu0 %v358
    %1881 = vmatmul.mubr.bf16.gmra.mrb[0].mxu0 %v357
    %v1882 = vpop.f32.mrb[0].mxu0
    %v1883 = vadd.f32 %v1842, %v1882
    %v1884 = vpop.f32.mrb[0].mxu0
    %v1885 = vadd.f32 %v1844, %v1884
    %v1886 = vpop.f32.mrb[0].mxu0
    %v1887 = vpop.f32.mrb[0].mxu0
    %1888 = vdwg.mxu0
    %1889 = vmatprep.subr.bf16.mxu0 %v1138
    %1890 = vmatpush1.bf16.msra.mxu0 %v1137
    %1891 = vmatprep.subr.bf16.mxu0 %v1146
    %1892 = vmatpush1.bf16.msra.mxu0 %v1145
    %1893 = vmatprep.subr.bf16.mxu0 %v1154
    %1894 = vmatpush1.bf16.msra.mxu0 %v1153
    %1895 = vmatprep.subr.bf16.mxu0 %v1162
    %1896 = vmatpush1.bf16.msra.mxu0 %v1161
    %1897 = vmatprep.subr.bf16.mxu0 %v1170
    %1898 = vmatpush1.bf16.msra.mxu0 %v1169
    %1899 = vmatprep.subr.bf16.mxu0 %v1178
    %1900 = vmatpush1.bf16.msra.mxu0 %v1177
    %1901 = vmatprep.subr.bf16.mxu0 %v1186
    %1902 = vmatpush1.bf16.msra.mxu0 %v1185
    %1903 = vmatprep.subr.bf16.mxu0 %v1194
    %1904 = vmatpush1.bf16.msra.mxu0 %v1193
    %1905 = vmatprep.subr.bf16.mxu0 %v1202
    %1906 = vmatpush1.bf16.msra.mxu0 %v1201
    %1907 = vmatprep.subr.bf16.mxu0 %v1210
    %1908 = vmatpush1.bf16.msra.mxu0 %v1209
    %1909 = vmatprep.subr.bf16.mxu0 %v1218
    %1910 = vmatpush1.bf16.msra.mxu0 %v1217
    %1911 = vmatprep.subr.bf16.mxu0 %v1226
    %1912 = vmatpush1.bf16.msra.mxu0 %v1225
    %1913 = vmatprep.subr.bf16.mxu0 %v1234
    %1914 = vmatpush1.bf16.msra.mxu0 %v1233
    %1915 = vmatprep.subr.bf16.mxu0 %v1242
    %1916 = vmatpush1.bf16.msra.mxu0 %v1241
    %1917 = vmatprep.subr.bf16.mxu0 %v1250
    %1918 = vmatpush1.bf16.msra.mxu0 %v1249
    %1919 = vmatprep.subr.bf16.mxu0 %v1258
    %1920 = vmatpush1.bf16.msra.mxu0 %v1257
    %1921 = vmatprep.mubr.bf16.mxu0 %v356
    %1922 = vmatmul.mubr.bf16.gmra.mrb[0].mxu0 %v349
    %v1923 = vpop.f32.mrb[0].mxu0
    %v1924 = vadd.f32 0.0, %v1923
    %v1925 = vpop.f32.mrb[0].mxu0
    %v1926 = vadd.f32 0.0, %v1925
    %v1927 = vpop.f32.mrb[0].mxu0
    %v1928 = vpop.f32.mrb[0].mxu0
    %1929 = vdwg.mxu0
    %1930 = vmatprep.subr.bf16.mxu0 %v1266
    %1931 = vmatpush1.bf16.msra.mxu0 %v1265
    %1932 = vmatprep.subr.bf16.mxu0 %v1274
    %1933 = vmatpush1.bf16.msra.mxu0 %v1273
    %1934 = vmatprep.subr.bf16.mxu0 %v1282
    %1935 = vmatpush1.bf16.msra.mxu0 %v1281
    %1936 = vmatprep.subr.bf16.mxu0 %v1290
    %1937 = vmatpush1.bf16.msra.mxu0 %v1289
    %1938 = vmatprep.subr.bf16.mxu0 %v1298
    %1939 = vmatpush1.bf16.msra.mxu0 %v1297
    %1940 = vmatprep.subr.bf16.mxu0 %v1306
    %1941 = vmatpush1.bf16.msra.mxu0 %v1305
    %1942 = vmatprep.subr.bf16.mxu0 %v1314
    %1943 = vmatpush1.bf16.msra.mxu0 %v1313
    %1944 = vmatprep.subr.bf16.mxu0 %v1322
    %1945 = vmatpush1.bf16.msra.mxu0 %v1321
    %1946 = vmatprep.subr.bf16.mxu0 %v1330
    %1947 = vmatpush1.bf16.msra.mxu0 %v1329
    %1948 = vmatprep.subr.bf16.mxu0 %v1338
    %1949 = vmatpush1.bf16.msra.mxu0 %v1337
    %1950 = vmatprep.subr.bf16.mxu0 %v1346
    %1951 = vmatpush1.bf16.msra.mxu0 %v1345
    %1952 = vmatprep.subr.bf16.mxu0 %v1354
    %1953 = vmatpush1.bf16.msra.mxu0 %v1353
    %1954 = vmatprep.subr.bf16.mxu0 %v1362
    %1955 = vmatpush1.bf16.msra.mxu0 %v1361
    %1956 = vmatprep.subr.bf16.mxu0 %v1370
    %1957 = vmatpush1.bf16.msra.mxu0 %v1369
    %1958 = vmatprep.subr.bf16.mxu0 %v1378
    %1959 = vmatpush1.bf16.msra.mxu0 %v1377
    %1960 = vmatprep.subr.bf16.mxu0 %v1386
    %1961 = vmatpush1.bf16.msra.mxu0 %v1385
    %1962 = vmatprep.mubr.bf16.mxu0 %v358
    %1963 = vmatmul.mubr.bf16.gmra.mrb[0].mxu0 %v357
    %v1964 = vpop.f32.mrb[0].mxu0
    %v1965 = vadd.f32 %v1924, %v1964
    %v1966 = vpop.f32.mrb[0].mxu0
    %v1967 = vadd.f32 %v1926, %v1966
    %v1968 = vpop.f32.mrb[0].mxu0
    %v1969 = vpop.f32.mrb[0].mxu0
    %1970 = vdwg.mxu0
    %v1979 = vcombine.low %v1719, %v1721
    %v1980 = vcombine.low %v1801, %v1803
    %v1982 = vunpack.c.l.s4 1983009808
    %v1983 = vunpack.c.0.s8 %v1982
    %v1984 = vlaneseq
    %v1985 = vshrl.u32 %v1984, 7
    %v1986 = vsub.s32 %v1983, %v1985
    %v1987 = vrot.slane %v1979, %v1986
    %v1989 = vunpack.c.l.s4 1983009808
    %v1990 = vunpack.c.0.s8 %v1989
    %v1991 = vlaneseq
    %v1992 = vshrl.u32 %v1991, 7
    %v1993 = vsub.s32 %v1990, %v1992
    %v1994 = vrot.slane %v1980, %v1993
    %v1995 = vcombine.low %v1987, %v1994
    %v1996 = vcombine.low %v1883, %v1885
    %v1997 = vcombine.low %v1965, %v1967
    %v1999 = vunpack.c.l.s4 1983009808
    %v2000 = vunpack.c.0.s8 %v1999
    %v2001 = vlaneseq
    %v2002 = vshrl.u32 %v2001, 7
    %v2003 = vsub.s32 %v2000, %v2002
    %v2004 = vrot.slane %v1996, %v2003
    %v2006 = vunpack.c.l.s4 1983009808
    %v2007 = vunpack.c.0.s8 %v2006
    %v2008 = vlaneseq
    %v2009 = vshrl.u32 %v2008, 7
    %v2010 = vsub.s32 %v2007, %v2009
    %v2011 = vrot.slane %v1997, %v2010
    %v2012 = vcombine.low %v2004, %v2011
    %v2015 = vadd.f32 %v75, %v1995
    %v2016 = vadd.f32 %v76, %v2012
    %2017 = vst [vmem:[#allocation10] sm:$0xff] %v2015
    %2018 = vst [vmem:[#allocation10 + $0x8] sm:$0xff] %v2016
    // Predicated region
    $region42: #{tpu_custom_call.1} parent=1 // pred_check
      %p2019 = pneg %p69
    $region43: #{tpu_custom_call.1} parent=1 // pred_check_branch
      %2021 = sbr.rel (%p2019) target = $region45
    $region44: #{tpu_custom_call.1} parent=1 // pred_region
      %v2022 = vld [vmem:[#allocation10] sm:$0xff]
      %v2023 = vld [vmem:[#allocation10 + $0x8] sm:$0xff]
      %v2024 = vld [vmem:[%s3] sm:$0xff]
      %v2026 = vlaneseq
      %v2027 = vshrl.u32 %v2026, 7
      %v2028 = vsub.s32 0, %v2027
      %v2029 = vrot.slane %v2024, %v2028
      %v2030 = vlaneseq
      %v2031 = vshrl.u32 %v2030, 7
      %v2032 = vsub.s32 1, %v2031
      %v2033 = vrot.slane %v2024, %v2032
      %v2034 = vlaneseq
      %v2035 = vshrl.u32 %v2034, 7
      %v2036 = vsub.s32 2, %v2035
      %v2037 = vrot.slane %v2024, %v2036
      %v2038 = vlaneseq
      %v2039 = vshrl.u32 %v2038, 7
      %v2040 = vsub.s32 3, %v2039
      %v2041 = vrot.slane %v2024, %v2040
      %v2042 = vlaneseq
      %v2043 = vshrl.u32 %v2042, 7
      %v2044 = vsub.s32 4, %v2043
      %v2045 = vrot.slane %v2024, %v2044
      %v2046 = vlaneseq
      %v2047 = vshrl.u32 %v2046, 7
      %v2048 = vsub.s32 5, %v2047
      %v2049 = vrot.slane %v2024, %v2048
      %v2050 = vlaneseq
      %v2051 = vshrl.u32 %v2050, 7
      %v2052 = vsub.s32 6, %v2051
      %v2053 = vrot.slane %v2024, %v2052
      %v2054 = vlaneseq
      %v2055 = vshrl.u32 %v2054, 7
      %v2056 = vsub.s32 7, %v2055
      %v2057 = vrot.slane %v2024, %v2056
      %v2058 = vcombine.low %v2029, %v2033
      %v2059 = vcombine.low %v2037, %v2041
      %v2061 = vunpack.c.l.s4 1983009808
      %v2062 = vunpack.c.0.s8 %v2061
      %v2063 = vlaneseq
      %v2064 = vshrl.u32 %v2063, 7
      %v2065 = vsub.s32 %v2062, %v2064
      %v2066 = vrot.slane %v2058, %v2065
      %v2068 = vunpack.c.l.s4 1983009808
      %v2069 = vunpack.c.0.s8 %v2068
      %v2070 = vlaneseq
      %v2071 = vshrl.u32 %v2070, 7
      %v2072 = vsub.s32 %v2069, %v2071
      %v2073 = vrot.slane %v2059, %v2072
      %v2074 = vcombine.low %v2066, %v2073
      %v2075 = vcombine.low %v2045, %v2049
      %v2076 = vcombine.low %v2053, %v2057
      %v2078 = vunpack.c.l.s4 1983009808
      %v2079 = vunpack.c.0.s8 %v2078
      %v2080 = vlaneseq
      %v2081 = vshrl.u32 %v2080, 7
      %v2082 = vsub.s32 %v2079, %v2081
      %v2083 = vrot.slane %v2075, %v2082
      %v2085 = vunpack.c.l.s4 1983009808
      %v2086 = vunpack.c.0.s8 %v2085
      %v2087 = vlaneseq
      %v2088 = vshrl.u32 %v2087, 7
      %v2089 = vsub.s32 %v2086, %v2088
      %v2090 = vrot.slane %v2076, %v2089
      %v2091 = vcombine.low %v2083, %v2090
      %v2094 = vadd.f32 %v2022, %v2074
      %v2095 = vadd.f32 %v2023, %v2091
      %v2096 = vsub.f32 0.0, %v2094
      %v2097 = vsub.f32 0.0, %v2095
      %v2098 = vmul.f32 %v2096, 1.442695
      %v2099 = vpow.pop %v2098
      %v2100 = vmul.f32 %v2097, 1.442695
      %v2101 = vpow.pop %v2100
      %v2102 = vadd.f32 %v2099, 1.0
      %v2103 = vadd.f32 %v2101, 1.0
      %v2104 = vrcp.pop %v2102
      %v2105 = vrcp.pop %v2103
      %s2106 = sld [smem:[#allocation2]]
      %v2107 = vld [vmem:[#allocation9] sm:$0xff]
      %v2108 = vld [vmem:[#allocation9 + $0x8] sm:$0xff]
      %v2109 = vstv %s2106
      %v2110 = vmul.f32 %v2109, %v2107
      %v2111 = vmul.f32 %v2109, %v2108
      %s2112 = sld [smem:[#allocation2 + $0x1]]
      %v2113 = vstv %s2112
      %v2114 = vmul.f32 %v2113, %v2104
      %v2115 = vmul.f32 %v2113, %v2105
      %v2116 = vadd.f32 %v2110, %v2114
      %v2117 = vadd.f32 %v2111, %v2115
      %2118 = vst [vmem:[#allocation10] sm:$0xff] %v2116
      %2119 = vst [vmem:[#allocation10 + $0x8] sm:$0xff] %v2117
    $region45: #{tpu_custom_call.1} parent=1 // pred_fallthru
      _
    // Predicated region
    $region46: #{tpu_custom_call.1} parent=1 // pred_check
      _
    $region47: #{tpu_custom_call.1} parent=1 // pred_check_branch
      %2121 = sbr.rel (0) target = $region49
    $region48: #{tpu_custom_call.1} parent=1 // pred_region
      %s2123 = ssub.s32 256, 256
      %2124 = vsyncadd [#allocation4], %s2123
      %s2126 = sshll.u32 [#allocation10], 4
      %s2127 = int_to_ptr.vmem [resolvable:$true] %s2126
      %2129 = dma.vmem_to_hbm [thread:$0]  %s2127, 256, %s5, [#allocation4]
    $region49: #{tpu_custom_call.1} parent=1 // pred_fallthru
      _
    // Predicated region
    $region50: #{tpu_custom_call.1} parent=1 // pred_check
      _
    $region51: #{tpu_custom_call.1} parent=1 // pred_check_branch
      %2131 = sbr.rel (0) target = $region53
    $region52: #{tpu_custom_call.1} parent=1 // pred_region
      %2132 = dma.done [#allocation4], 256
    $region53: #{tpu_custom_call.1} parent=1 // pred_fallthru
      _
    %2133 = vsyncpa [#allocation3], 1
    %2134 = vsyncpa [#allocation8], 1
    %2135 = vsyncpa [#allocation4], 1
    %2136 = vsyncpa [#allocation5], 1

</llo_original>
